<compile_context>
chip_gen: v5e
topology: v5e:2x2
jax: 0.10.0
libtpu: 0.0.40
codegen_flags: <defaults>
</compile_context>

<pallas_src>
import functools

import jax
import jax.numpy as jnp
from jax import lax
from jax.experimental import pallas as pl
from jax.experimental.pallas import tpu as pltpu


def routing_kernel(mv_ref, x_ref, vc_ref, w1_ref, b1_ref, w2_ref, bq_ref,
                   lnw_ref, lnb_ref, out_ref, *, num_experts):
    e1 = num_experts + 1
    lanes = out_ref.shape[-1]

    # fc1 + exact (erf) GELU -- matches torch.nn.functional.gelu default.
    x = x_ref[...]                                                  # [TB, D]
    h = jnp.dot(x, w1_ref[...], preferred_element_type=jnp.float32) + b1_ref[...]
    h = 0.5 * h * (1.0 + lax.erf(h * 0.7071067811865476))

    # fc2 into the lane-padded slab; bq already holds (b2 + q_values), zero in
    # the padding lanes, so z's padding lanes are exactly 0.
    z = jnp.dot(h, w2_ref[...], preferred_element_type=jnp.float32) + bq_ref[...]  # [TB, LANES]

    # LayerNorm over the first E+1 lanes only (one-pass variance).
    col = lax.broadcasted_iota(jnp.int32, z.shape, 1)
    valid = col < e1
    zv = jnp.where(valid, z, 0.0)
    inv_n = jnp.float32(1.0 / e1)
    mean = jnp.sum(zv, axis=-1, keepdims=True) * inv_n
    var = jnp.sum(zv * zv, axis=-1, keepdims=True) * inv_n - mean * mean
    normed = (z - mean) * lax.rsqrt(var + jnp.float32(1e-5))
    normed = normed * lnw_ref[...] + lnb_ref[...]
    clamped = jnp.clip(normed, -10.0, 10.0)

    # Visit-count mask: expand [TB, E] -> [TB, LANES] entirely in-kernel via a
    # tiny selector matmul (column e of the slab gets mask of expert e; the
    # dummy column E and the padding lanes get 0 from the selector).
    mask_f = (vc_ref[...] >= mv_ref[0]).astype(jnp.float32)        # [TB, E]
    sel = (lax.broadcasted_iota(jnp.int32, (num_experts, lanes), 0) ==
           lax.broadcasted_iota(jnp.int32, (num_experts, lanes), 1)
           ).astype(jnp.float32)                                    # [E, LANES]
    mask_wide = jnp.dot(mask_f, sel, preferred_element_type=jnp.float32)

    # Masked experts -> -inf; padding lanes also -inf so the slab is directly
    # consumable by a downstream softmax / argmax over experts.
    out_ref[...] = jnp.where((mask_wide > 0.5) | jnp.logical_not(valid),
                             -jnp.inf, clamped)


def prepare_params(raw, num_experts):
    """One-time layout prep (call outside the per-step hot path)."""
    e1 = num_experts + 1
    lanes = pl.cdiv(e1, 128) * 128          # 128 for any small expert count
    pad = lanes - e1
    h = raw["w1"].shape[1]
    return {
        "num_experts": num_experts,
        "lanes": lanes,
        "w1": raw["w1"],                                            # [D, H]
        "b1": raw["b1"].reshape(1, h),                              # [1, H]
        "w2p": jnp.pad(raw["w2"], ((0, 0), (0, pad))),              # [H, LANES]
        "bqp": jnp.pad((raw["b2"] + raw["q"]).reshape(1, e1),
                       ((0, 0), (0, pad))),                         # [1, LANES]
        "lnwp": jnp.pad(raw["ln_w"].reshape(1, e1), ((0, 0), (0, pad))),
        "lnbp": jnp.pad(raw["ln_b"].reshape(1, e1), ((0, 0), (0, pad))),
    }


def routing_forward_padded(pp, x_summary, visit_counts, max_visits, *, block_b=128):
    """Returns the lane-dense [B_total, LANES] logit slab (padding lanes = -inf)."""
    b_tot, d = x_summary.shape
    e = pp["num_experts"]
    lanes = pp["lanes"]
    h = pp["w1"].shape[1]

    tb = block_b if (b_tot % block_b == 0) else b_tot   # fall back to full-dim block
    grid = (b_tot // tb,)

    mv = jnp.asarray([max_visits], dtype=jnp.int32)
    kernel = functools.partial(routing_kernel, num_experts=e)

    grid_spec = pltpu.PrefetchScalarGridSpec(
        num_scalar_prefetch=1,
        grid=grid,
        in_specs=[
            pl.BlockSpec((tb, d), lambda i, mvr: (i, 0)),       # x_summary tile
            pl.BlockSpec((tb, e), lambda i, mvr: (i, 0)),       # visit_counts tile
            pl.BlockSpec((d, h), lambda i, mvr: (0, 0)),        # w1
            pl.BlockSpec((1, h), lambda i, mvr: (0, 0)),        # b1
            pl.BlockSpec((h, lanes), lambda i, mvr: (0, 0)),    # w2 (lane-padded)
            pl.BlockSpec((1, lanes), lambda i, mvr: (0, 0)),    # b2 + q (lane-padded)
            pl.BlockSpec((1, lanes), lambda i, mvr: (0, 0)),    # LN weight
            pl.BlockSpec((1, lanes), lambda i, mvr: (0, 0)),    # LN bias
        ],
        out_specs=pl.BlockSpec((tb, lanes), lambda i, mvr: (i, 0)),
    )

    return pl.pallas_call(
        kernel,
        out_shape=jax.ShapeDtypeStruct((b_tot, lanes), jnp.float32),
        grid_spec=grid_spec,
        compiler_params=pltpu.CompilerParams(
            dimension_semantics=("parallel",)),
    )(mv, x_summary, visit_counts.astype(jnp.int32),
      pp["w1"], pp["b1"], pp["w2p"], pp["bqp"], pp["lnwp"], pp["lnbp"])


def routing_controller_forward(pp, x_summary, visit_counts, max_visits, *, block_b=128):
    """Module-equivalent [B_total, num_experts + 1] output (thin view of the slab)."""
    padded = routing_forward_padded(pp, x_summary, visit_counts, max_visits,
                                    block_b=block_b)
    return padded[:, :pp["num_experts"] + 1]


def reference_forward(raw, x_summary, visit_counts, max_visits):
    h = x_summary @ raw["w1"] + raw["b1"]
    h = 0.5 * h * (1.0 + lax.erf(h / jnp.sqrt(2.0)))
    logits = h @ raw["w2"] + raw["b2"]
    z = logits + raw["q"]
    mean = jnp.mean(z, axis=-1, keepdims=True)
    var = jnp.mean((z - mean) ** 2, axis=-1, keepdims=True)
    normed = (z - mean) / jnp.sqrt(var + 1e-5)
    normed = normed * raw["ln_w"] + raw["ln_b"]
    clamped = jnp.clip(normed, -10.0, 10.0)
    mask = visit_counts >= max_visits
    ext_mask = jnp.concatenate([mask, jnp.zeros_like(mask[:, :1])], axis=-1)
    return jnp.where(ext_mask, -jnp.inf, clamped)


if __name__ == "__main__":
    # Module-implied sizes: input_dim=32, hidden=32, num_experts=7.
    # Per perf feedback, T=32 routing steps of batch 8 are STACKED into one
    # pallas_call (256 rows, two 128-row tiles on the grid).
    D, H, E = 32, 32, 7
    B_PER_STEP, T = 8, 32
    B_TOTAL = B_PER_STEP * T
    MAX_VISITS = 2

    key = jax.random.PRNGKey(0)
    k1, k2, k3, k4, k5, k6 = jax.random.split(key, 6)

    raw_params = {
        # stored [in, out] (transposed relative to torch's [out, in])
        "w1": jax.random.normal(k1, (D, H), jnp.float32) * (1.0 / jnp.sqrt(D)),
        "b1": jax.random.normal(k2, (H,), jnp.float32) * 0.01,
        "w2": jax.random.normal(k3, (H, E + 1), jnp.float32) * (1.0 / jnp.sqrt(H)),
        "b2": jax.random.normal(k4, (E + 1,), jnp.float32) * 0.01,
        "q": jnp.zeros((E + 1,), jnp.float32),        # q_values init = zeros
        "ln_w": jnp.ones((E + 1,), jnp.float32),      # LayerNorm default init
        "ln_b": jnp.zeros((E + 1,), jnp.float32),
    }
    pp = prepare_params(raw_params, E)                # one-time lane padding

    x_summary = jax.random.normal(k5, (B_TOTAL, D), jnp.float32)
    visit_counts = jax.random.randint(k6, (B_TOTAL, E), 0, 4, dtype=jnp.int32)

    padded = routing_forward_padded(pp, x_summary, visit_counts, MAX_VISITS)
    padded = jax.block_until_ready(padded)
    out = padded[:, :E + 1]

    ref = reference_forward(raw_params, x_summary, visit_counts, MAX_VISITS)

    finite = jnp.isfinite(ref)
    assert bool(jnp.all(finite == jnp.isfinite(out)))
    assert bool(jnp.allclose(jnp.where(finite, out, 0.0),
                             jnp.where(finite, ref, 0.0),
                             atol=1e-4, rtol=1e-4))
    # padding lanes of the slab must be -inf (consumable by downstream softmax/argmax)
    assert bool(jnp.all(jnp.isneginf(padded[:, E + 1:])))
    print("KERNEL_OK")
</pallas_src>

<mosaic_0001>
module attributes {stable_mosaic.version = 11 : i64} {
  func.func @routing_kernel(%arg0: i32, %arg1: memref<1xi32, #tpu.memory_space<smem>>, %arg2: memref<128x32xf32, #tpu.memory_space<vmem>>, %arg3: memref<128x7xi32, #tpu.memory_space<vmem>>, %arg4: memref<32x32xf32, #tpu.memory_space<vmem>>, %arg5: memref<1x32xf32, #tpu.memory_space<vmem>>, %arg6: memref<32x128xf32, #tpu.memory_space<vmem>>, %arg7: memref<1x128xf32, #tpu.memory_space<vmem>>, %arg8: memref<1x128xf32, #tpu.memory_space<vmem>>, %arg9: memref<1x128xf32, #tpu.memory_space<vmem>>, %arg10: memref<128x128xf32, #tpu.memory_space<vmem>>) attributes {dimension_semantics = [#tpu.dimension_semantics<parallel>], iteration_bounds = array<i64: 2>, scalar_prefetch = 1 : i64, scratch_operands = 0 : i64, tpu.core_type = #tpu.core_type<tc>, window_params = [{transform_indices = @transform_0, window_bounds = array<i64: 128, 32>}, {transform_indices = @transform_1, window_bounds = array<i64: 128, 7>}, {pipeline_mode = #tpu.pipeline_mode<synchronous>, transform_indices = @transform_2, window_bounds = array<i64: 32, 32>}, {pipeline_mode = #tpu.pipeline_mode<synchronous>, transform_indices = @transform_3, window_bounds = array<i64: 1, 32>}, {pipeline_mode = #tpu.pipeline_mode<synchronous>, transform_indices = @transform_4, window_bounds = array<i64: 32, 128>}, {pipeline_mode = #tpu.pipeline_mode<synchronous>, transform_indices = @transform_5, window_bounds = array<i64: 1, 128>}, {pipeline_mode = #tpu.pipeline_mode<synchronous>, transform_indices = @transform_6, window_bounds = array<i64: 1, 128>}, {pipeline_mode = #tpu.pipeline_mode<synchronous>, transform_indices = @transform_7, window_bounds = array<i64: 1, 128>}, {transform_indices = @transform_8, window_bounds = array<i64: 128, 128>}]} {
    %c0 = arith.constant 0 : index
    %c0_0 = arith.constant 0 : index
    %0 = vector.load %arg2[%c0, %c0_0] : memref<128x32xf32, #tpu.memory_space<vmem>>, vector<128x32xf32>
    %c0_1 = arith.constant 0 : index
    %c0_2 = arith.constant 0 : index
    %1 = vector.load %arg4[%c0_1, %c0_2] : memref<32x32xf32, #tpu.memory_space<vmem>>, vector<32x32xf32>
    %cst = arith.constant dense<0.000000e+00> : vector<128x32xf32>
    %2 = tpu.matmul %0, %1, %cst {dimension_numbers = #tpu.dot_dimension_numbers<[1], [0], [0], [1], [0, 0, 1, 1], [], []>} : vector<128x32xf32>, vector<32x32xf32>, vector<128x32xf32> -> vector<128x32xf32>
    %c0_3 = arith.constant 0 : index
    %c0_4 = arith.constant 0 : index
    %3 = vector.load %arg5[%c0_3, %c0_4] : memref<1x32xf32, #tpu.memory_space<vmem>>, vector<1x32xf32>
    %4 = vector.broadcast %3 : vector<1x32xf32> to vector<128x32xf32>
    %5 = arith.addf %2, %4 : vector<128x32xf32>
    %cst_5 = arith.constant 5.000000e-01 : f32
    %6 = vector.broadcast %cst_5 : f32 to vector<128x32xf32>
    %7 = arith.mulf %6, %5 : vector<128x32xf32>
    %cst_6 = arith.constant 0.707106769 : f32
    %8 = vector.broadcast %cst_6 : f32 to vector<128x32xf32>
    %9 = arith.mulf %5, %8 : vector<128x32xf32>
    %10 = math.erf %9 : vector<128x32xf32>
    %cst_7 = arith.constant 1.000000e+00 : f32
    %11 = vector.broadcast %cst_7 : f32 to vector<128x32xf32>
    %12 = arith.addf %11, %10 : vector<128x32xf32>
    %13 = arith.mulf %7, %12 : vector<128x32xf32>
    %c0_8 = arith.constant 0 : index
    %c0_9 = arith.constant 0 : index
    %14 = vector.load %arg6[%c0_8, %c0_9] : memref<32x128xf32, #tpu.memory_space<vmem>>, vector<32x128xf32>
    %cst_10 = arith.constant dense<0.000000e+00> : vector<128x128xf32>
    %15 = tpu.matmul %13, %14, %cst_10 {dimension_numbers = #tpu.dot_dimension_numbers<[1], [0], [0], [1], [0, 0, 1, 1], [], []>} : vector<128x32xf32>, vector<32x128xf32>, vector<128x128xf32> -> vector<128x128xf32>
    %c0_11 = arith.constant 0 : index
    %c0_12 = arith.constant 0 : index
    %16 = vector.load %arg7[%c0_11, %c0_12] : memref<1x128xf32, #tpu.memory_space<vmem>>, vector<1x128xf32>
    %17 = vector.broadcast %16 : vector<1x128xf32> to vector<128x128xf32>
    %18 = arith.addf %15, %17 : vector<128x128xf32>
    %19 = tpu.iota {dimensions = array<i32: 1>} : vector<128x128xi32>
    %c8_i32 = arith.constant 8 : i32
    %20 = vector.broadcast %c8_i32 : i32 to vector<128x128xi32>
    %21 = arith.cmpi slt, %19, %20 : vector<128x128xi32>
    %cst_13 = arith.constant 0.000000e+00 : f32
    %22 = vector.broadcast %cst_13 : f32 to vector<128x128xf32>
    %23 = arith.select %21, %18, %22 : vector<128x128xi1>, vector<128x128xf32>
    %cst_14 = arith.constant dense<0.000000e+00> : vector<128xf32>
    %24 = vector.multi_reduction <add>, %23, %cst_14 [1] : vector<128x128xf32> to vector<128xf32>
    %25 = vector.shape_cast %24 : vector<128xf32> to vector<128x1xf32>
    %cst_15 = arith.constant 1.250000e-01 : f32
    %26 = vector.broadcast %cst_15 : f32 to vector<128x1xf32>
    %27 = arith.mulf %25, %26 : vector<128x1xf32>
    %28 = arith.mulf %23, %23 : vector<128x128xf32>
    %cst_16 = arith.constant dense<0.000000e+00> : vector<128xf32>
    %29 = vector.multi_reduction <add>, %28, %cst_16 [1] : vector<128x128xf32> to vector<128xf32>
    %30 = vector.shape_cast %29 : vector<128xf32> to vector<128x1xf32>
    %cst_17 = arith.constant 1.250000e-01 : f32
    %31 = vector.broadcast %cst_17 : f32 to vector<128x1xf32>
    %32 = arith.mulf %30, %31 : vector<128x1xf32>
    %33 = arith.mulf %27, %27 : vector<128x1xf32>
    %34 = arith.subf %32, %33 : vector<128x1xf32>
    %35 = vector.broadcast %27 : vector<128x1xf32> to vector<128x128xf32>
    %36 = arith.subf %18, %35 : vector<128x128xf32>
    %cst_18 = arith.constant 9.99999974E-6 : f32
    %37 = vector.broadcast %cst_18 : f32 to vector<128x1xf32>
    %38 = arith.addf %34, %37 : vector<128x1xf32>
    %39 = math.rsqrt %38 : vector<128x1xf32>
    %40 = vector.broadcast %39 : vector<128x1xf32> to vector<128x128xf32>
    %41 = arith.mulf %36, %40 : vector<128x128xf32>
    %c0_19 = arith.constant 0 : index
    %c0_20 = arith.constant 0 : index
    %42 = vector.load %arg8[%c0_19, %c0_20] : memref<1x128xf32, #tpu.memory_space<vmem>>, vector<1x128xf32>
    %43 = vector.broadcast %42 : vector<1x128xf32> to vector<128x128xf32>
    %44 = arith.mulf %41, %43 : vector<128x128xf32>
    %c0_21 = arith.constant 0 : index
    %c0_22 = arith.constant 0 : index
    %45 = vector.load %arg9[%c0_21, %c0_22] : memref<1x128xf32, #tpu.memory_space<vmem>>, vector<1x128xf32>
    %46 = vector.broadcast %45 : vector<1x128xf32> to vector<128x128xf32>
    %47 = arith.addf %44, %46 : vector<128x128xf32>
    %cst_23 = arith.constant -1.000000e+01 : f32
    %cst_24 = arith.constant 1.000000e+01 : f32
    %48 = vector.broadcast %cst_23 : f32 to vector<128x128xf32>
    %49 = arith.maximumf %48, %47 : vector<128x128xf32>
    %50 = vector.broadcast %cst_24 : f32 to vector<128x128xf32>
    %51 = arith.minimumf %50, %49 : vector<128x128xf32>
    %c0_25 = arith.constant 0 : index
    %c0_26 = arith.constant 0 : index
    %52 = vector.load %arg3[%c0_25, %c0_26] : memref<128x7xi32, #tpu.memory_space<vmem>>, vector<128x7xi32>
    %c0_27 = arith.constant 0 : index
    %53 = memref.load %arg1[%c0_27] : memref<1xi32, #tpu.memory_space<smem>>
    %54 = vector.broadcast %53 : i32 to vector<128x7xi32>
    %55 = arith.cmpi sge, %52, %54 : vector<128x7xi32>
    %56 = arith.extui %55 : vector<128x7xi1> to vector<128x7xi32>
    %57 = arith.sitofp %56 : vector<128x7xi32> to vector<128x7xf32>
    %58 = tpu.iota {dimensions = array<i32: 0>} : vector<7x128xi32>
    %59 = tpu.iota {dimensions = array<i32: 1>} : vector<7x128xi32>
    %60 = arith.cmpi eq, %58, %59 : vector<7x128xi32>
    %61 = arith.extui %60 : vector<7x128xi1> to vector<7x128xi32>
    %62 = arith.sitofp %61 : vector<7x128xi32> to vector<7x128xf32>
    %cst_28 = arith.constant dense<0.000000e+00> : vector<128x128xf32>
    %63 = tpu.matmul %57, %62, %cst_28 {dimension_numbers = #tpu.dot_dimension_numbers<[1], [0], [0], [1], [0, 0, 1, 1], [], []>} : vector<128x7xf32>, vector<7x128xf32>, vector<128x128xf32> -> vector<128x128xf32>
    %cst_29 = arith.constant 5.000000e-01 : f32
    %64 = vector.broadcast %cst_29 : f32 to vector<128x128xf32>
    %65 = arith.cmpf ogt, %63, %64 : vector<128x128xf32>
    %cst_30 = arith.constant dense<true> : vector<128x128xi1>
    %66 = arith.xori %21, %cst_30 : vector<128x128xi1>
    %67 = arith.ori %65, %66 : vector<128x128xi1>
    %cst_31 = arith.constant 0xFF800000 : f32
    %68 = vector.broadcast %cst_31 : f32 to vector<128x128xf32>
    %69 = arith.select %67, %68, %51 : vector<128x128xi1>, vector<128x128xf32>
    %c0_32 = arith.constant 0 : index
    %c0_33 = arith.constant 0 : index
    %70 = vector.load %arg10[%c0_32, %c0_33] : memref<128x128xf32, #tpu.memory_space<vmem>>, vector<128x128xf32>
    tpu.vector_store %arg10[%c0_32, %c0_33], %69 {strides = array<i32>} : memref<128x128xf32, #tpu.memory_space<vmem>>, vector<128x128xf32>,
    return
  }
  func.func @transform_0(%arg0: i32, %arg1: memref<1xi32, #tpu.memory_space<smem>>) -> (i32, i32) {
    %c0_i32 = arith.constant 0 : i32
    %c0_i32_0 = arith.constant 0 : i32
    return %arg0, %c0_i32 : i32, i32
  }
  func.func @transform_1(%arg0: i32, %arg1: memref<1xi32, #tpu.memory_space<smem>>) -> (i32, i32) {
    %c0_i32 = arith.constant 0 : i32
    %c0_i32_0 = arith.constant 0 : i32
    return %arg0, %c0_i32 : i32, i32
  }
  func.func @transform_2(%arg0: i32, %arg1: memref<1xi32, #tpu.memory_space<smem>>) -> (i32, i32) {
    %c0_i32 = arith.constant 0 : i32
    %c0_i32_0 = arith.constant 0 : i32
    %c0_i32_1 = arith.constant 0 : i32
    return %c0_i32, %c0_i32_0 : i32, i32
  }
  func.func @transform_3(%arg0: i32, %arg1: memref<1xi32, #tpu.memory_space<smem>>) -> (i32, i32) {
    %c0_i32 = arith.constant 0 : i32
    %c0_i32_0 = arith.constant 0 : i32
    %c0_i32_1 = arith.constant 0 : i32
    return %c0_i32, %c0_i32_0 : i32, i32
  }
  func.func @transform_4(%arg0: i32, %arg1: memref<1xi32, #tpu.memory_space<smem>>) -> (i32, i32) {
    %c0_i32 = arith.constant 0 : i32
    %c0_i32_0 = arith.constant 0 : i32
    %c0_i32_1 = arith.constant 0 : i32
    return %c0_i32, %c0_i32_0 : i32, i32
  }
  func.func @transform_5(%arg0: i32, %arg1: memref<1xi32, #tpu.memory_space<smem>>) -> (i32, i32) {
    %c0_i32 = arith.constant 0 : i32
    %c0_i32_0 = arith.constant 0 : i32
    %c0_i32_1 = arith.constant 0 : i32
    return %c0_i32, %c0_i32_0 : i32, i32
  }
  func.func @transform_6(%arg0: i32, %arg1: memref<1xi32, #tpu.memory_space<smem>>) -> (i32, i32) {
    %c0_i32 = arith.constant 0 : i32
    %c0_i32_0 = arith.constant 0 : i32
    %c0_i32_1 = arith.constant 0 : i32
    return %c0_i32, %c0_i32_0 : i32, i32
  }
  func.func @transform_7(%arg0: i32, %arg1: memref<1xi32, #tpu.memory_space<smem>>) -> (i32, i32) {
    %c0_i32 = arith.constant 0 : i32
    %c0_i32_0 = arith.constant 0 : i32
    %c0_i32_1 = arith.constant 0 : i32
    return %c0_i32, %c0_i32_0 : i32, i32
  }
  func.func @transform_8(%arg0: i32, %arg1: memref<1xi32, #tpu.memory_space<smem>>) -> (i32, i32) {
    %c0_i32 = arith.constant 0 : i32
    %c0_i32_0 = arith.constant 0 : i32
    return %arg0, %c0_i32 : i32, i32
  }
}

</mosaic_0001>

<llo_original>
// kernel: tpu_custom_call.1
$region0: #{tpu_custom_call.1}
  #allocation0 [shape = 'u32[]', space=smem, size = 0x4, offset = 0x4, fixed_abs, tag = 'smem constant byte address 0x4 - core index']
  #allocation1 [shape = 'u32[72,128]{1,0:T(1,128)}', space=vmem, size = 0x9000, scoped, tag = 'internal scratch']
  #allocation2 [shape = 's32[1]{0}', space=sflag, size = 0x4, scoped, tag = 'scoped memory for tpu_custom_call.1']
  #allocation3 [shape = 's32[1]{0:T(128)S(6)}', space=smem, size = 0x200, scoped, tag = 'prefetched SMEM operand 0']
  %s0 = inlined_call_operand.<no memory space> [shape: s32[1], index: 0, kind: input, shape index: {}]
  %s1 = inlined_call_operand.vmem [shape: f32[256,32], index: 1, kind: input, shape index: {}]
  %s2 = inlined_call_operand.vmem [shape: s32[256,7], index: 2, kind: input, shape index: {}]
  %s3 = inlined_call_operand.vmem [shape: f32[32,32], index: 3, kind: input, shape index: {}]
  %s4 = inlined_call_operand.vmem [shape: f32[1,32], index: 4, kind: input, shape index: {}]
  %s5 = inlined_call_operand.vmem [shape: f32[32,128], index: 5, kind: input, shape index: {}]
  %s6 = inlined_call_operand.vmem [shape: f32[1,128], index: 6, kind: input, shape index: {}]
  %s7 = inlined_call_operand.vmem [shape: f32[1,128], index: 7, kind: input, shape index: {}]
  %s8 = inlined_call_operand.vmem [shape: f32[1,128], index: 8, kind: input, shape index: {}]
  %s9 = inlined_call_operand.hbm [shape: f32[256,128], index: 9, kind: output, shape index: {}]
  %s10 = sld [smem:[#allocation0]]
  $region65: #{tpu_custom_call.1} parent=0
    _
  %s12 = ssub.s32 1, %s10
  %s13 = scalar_select 0, %s12, %s10
  %14 = sst [smem:[#allocation3]] %s0
  $region1: #{tpu_custom_call.1} parent=0
    #allocation4 [shape = 'u8[131072]{0}', space=vmem, size = 0x20000, scoped, tag = 'output window, operand 0']
    #allocation5 [shape = 's32[2]{0}', space=sflag, size = 0x8, scoped, tag = 'scoped memory for tpu_custom_call.1']
    %15 = vsyncpa [#allocation5], 0
    %s16 = scalar_lea.sflag [#allocation5], 1
    %17 = vsyncpa %s16, 0
    loop: start=0, step=1, limit=4
    $region2: #{tpu_custom_call.1} parent=1 // loop_pre_header
      _
    $region3: #{tpu_custom_call.1} parent=1 // loop_header
      %s19 = sphi 0, %s23
      %p20 = scmp.ge.s32.totalorder %s19, 4
      %s29 = sphi 0, %s31
      %s32 = sphi 0, %s29
      %s33 = sphi 0, %s32
      %s49 = sphi 0, %s33
      %s55 = sphi 0, %s57
      %s58 = sphi 0, %s55
      %s59 = sphi 0, %s58
      %s75 = sphi 0, %s59
      %s79 = sphi 0, %s79
      %s81 = sphi 0, %s79
      %s82 = sphi 0, %s81
      %s96 = sphi 0, %s82
      %s100 = sphi 0, %s100
      %s102 = sphi 0, %s100
      %s103 = sphi 0, %s102
      %s117 = sphi 0, %s103
      %s121 = sphi 0, %s121
      %s123 = sphi 0, %s121
      %s124 = sphi 0, %s123
      %s138 = sphi 0, %s124
      %s142 = sphi 0, %s142
      %s144 = sphi 0, %s142
      %s145 = sphi 0, %s144
      %s159 = sphi 0, %s145
      %s163 = sphi 0, %s163
      %s165 = sphi 0, %s163
      %s166 = sphi 0, %s165
      %s180 = sphi 0, %s166
      %s184 = sphi 0, %s184
      %s186 = sphi 0, %s184
      %s187 = sphi 0, %s186
      %s201 = sphi 0, %s187
      %s207 = sphi 0, %s209
      %s210 = sphi 0, %s207
      %s211 = sphi 0, %s210
      %s227 = sphi 0, %s211
    $region4: #{tpu_custom_call.1} parent=1 // loop_header_branch
      %22 = sbr.rel (%p20) target = $region8
    $region5: #{tpu_custom_call.1} parent=1 // loop_body
      %s24 = ssub.s32 %s19, 1
      %s25 = ssub.s32 %s19, 2
      %s26 = sadd.s32 %s19, 1
      %s27 = ssub.s32 %s19, %s26
      %p28 = scmp.eq.s32.totalorder %s27, 0
      %s30 = sadd.s32 %s29, 1
      %s31 = scalar_select %p28, %s29, %s30
      %p34 = pneg %p28
      %p35 = scmp.eq.s32.totalorder %s19, 1
      %p36 = por %p34, %p35
      %p37 = scmp.ne.s32.totalorder %s29, %s32
      %p38 = scmp.eq.s32.totalorder %s19, 0
      %p39 = por %p37, %p38
      %p40 = scmp.ne.s32.totalorder %s29, %s32
      %p41 = scmp.eq.s32.totalorder %s24, 1
      %p42 = por %p40, %p41
      %p43 = scmp.ne.s32.totalorder %s32, %s33
      %p44 = scmp.eq.s32.totalorder %s24, 0
      %p45 = por %p43, %p44
      %p46 = scmp.ne.s32.totalorder %s32, %s33
      %p47 = scmp.eq.s32.totalorder %s25, 1
      %p48 = por %p46, %p47
      %p50 = scmp.ne.s32.totalorder %s33, %s49
      %p51 = scmp.eq.s32.totalorder %s25, 0
      %p52 = por %p50, %p51
      %s53 = ssub.s32 %s19, %s26
      %p54 = scmp.eq.s32.totalorder %s53, 0
      %s56 = sadd.s32 %s55, 1
      %s57 = scalar_select %p54, %s55, %s56
      %p60 = pneg %p54
      %p61 = scmp.eq.s32.totalorder %s19, 1
      %p62 = por %p60, %p61
      %p63 = scmp.ne.s32.totalorder %s55, %s58
      %p64 = scmp.eq.s32.totalorder %s19, 0
      %p65 = por %p63, %p64
      %p66 = scmp.ne.s32.totalorder %s55, %s58
      %p67 = scmp.eq.s32.totalorder %s24, 1
      %p68 = por %p66, %p67
      %p69 = scmp.ne.s32.totalorder %s58, %s59
      %p70 = scmp.eq.s32.totalorder %s24, 0
      %p71 = por %p69, %p70
      %p72 = scmp.ne.s32.totalorder %s58, %s59
      %p73 = scmp.eq.s32.totalorder %s25, 1
      %p74 = por %p72, %p73
      %p76 = scmp.ne.s32.totalorder %s59, %s75
      %p77 = scmp.eq.s32.totalorder %s25, 0
      %p78 = por %p76, %p77
      %s80 = sadd.s32 %s79, 1
      %p83 = scmp.eq.s32.totalorder %s19, 1
      %p84 = scmp.ne.s32.totalorder %s79, %s81
      %p85 = scmp.eq.s32.totalorder %s19, 0
      %p86 = por %p84, %p85
      %p87 = scmp.ne.s32.totalorder %s79, %s81
      %p88 = scmp.eq.s32.totalorder %s24, 1
      %p89 = por %p87, %p88
      %p90 = scmp.ne.s32.totalorder %s81, %s82
      %p91 = scmp.eq.s32.totalorder %s24, 0
      %p92 = por %p90, %p91
      %p93 = scmp.ne.s32.totalorder %s81, %s82
      %p94 = scmp.eq.s32.totalorder %s25, 1
      %p95 = por %p93, %p94
      %p97 = scmp.ne.s32.totalorder %s82, %s96
      %p98 = scmp.eq.s32.totalorder %s25, 0
      %p99 = por %p97, %p98
      %s101 = sadd.s32 %s100, 1
      %p104 = scmp.eq.s32.totalorder %s19, 1
      %p105 = scmp.ne.s32.totalorder %s100, %s102
      %p106 = scmp.eq.s32.totalorder %s19, 0
      %p107 = por %p105, %p106
      %p108 = scmp.ne.s32.totalorder %s100, %s102
      %p109 = scmp.eq.s32.totalorder %s24, 1
      %p110 = por %p108, %p109
      %p111 = scmp.ne.s32.totalorder %s102, %s103
      %p112 = scmp.eq.s32.totalorder %s24, 0
      %p113 = por %p111, %p112
      %p114 = scmp.ne.s32.totalorder %s102, %s103
      %p115 = scmp.eq.s32.totalorder %s25, 1
      %p116 = por %p114, %p115
      %p118 = scmp.ne.s32.totalorder %s103, %s117
      %p119 = scmp.eq.s32.totalorder %s25, 0
      %p120 = por %p118, %p119
      %s122 = sadd.s32 %s121, 1
      %p125 = scmp.eq.s32.totalorder %s19, 1
      %p126 = scmp.ne.s32.totalorder %s121, %s123
      %p127 = scmp.eq.s32.totalorder %s19, 0
      %p128 = por %p126, %p127
      %p129 = scmp.ne.s32.totalorder %s121, %s123
      %p130 = scmp.eq.s32.totalorder %s24, 1
      %p131 = por %p129, %p130
      %p132 = scmp.ne.s32.totalorder %s123, %s124
      %p133 = scmp.eq.s32.totalorder %s24, 0
      %p134 = por %p132, %p133
      %p135 = scmp.ne.s32.totalorder %s123, %s124
      %p136 = scmp.eq.s32.totalorder %s25, 1
      %p137 = por %p135, %p136
      %p139 = scmp.ne.s32.totalorder %s124, %s138
      %p140 = scmp.eq.s32.totalorder %s25, 0
      %p141 = por %p139, %p140
      %s143 = sadd.s32 %s142, 1
      %p146 = scmp.eq.s32.totalorder %s19, 1
      %p147 = scmp.ne.s32.totalorder %s142, %s144
      %p148 = scmp.eq.s32.totalorder %s19, 0
      %p149 = por %p147, %p148
      %p150 = scmp.ne.s32.totalorder %s142, %s144
      %p151 = scmp.eq.s32.totalorder %s24, 1
      %p152 = por %p150, %p151
      %p153 = scmp.ne.s32.totalorder %s144, %s145
      %p154 = scmp.eq.s32.totalorder %s24, 0
      %p155 = por %p153, %p154
      %p156 = scmp.ne.s32.totalorder %s144, %s145
      %p157 = scmp.eq.s32.totalorder %s25, 1
      %p158 = por %p156, %p157
      %p160 = scmp.ne.s32.totalorder %s145, %s159
      %p161 = scmp.eq.s32.totalorder %s25, 0
      %p162 = por %p160, %p161
      %s164 = sadd.s32 %s163, 1
      %p167 = scmp.eq.s32.totalorder %s19, 1
      %p168 = scmp.ne.s32.totalorder %s163, %s165
      %p169 = scmp.eq.s32.totalorder %s19, 0
      %p170 = por %p168, %p169
      %p171 = scmp.ne.s32.totalorder %s163, %s165
      %p172 = scmp.eq.s32.totalorder %s24, 1
      %p173 = por %p171, %p172
      %p174 = scmp.ne.s32.totalorder %s165, %s166
      %p175 = scmp.eq.s32.totalorder %s24, 0
      %p176 = por %p174, %p175
      %p177 = scmp.ne.s32.totalorder %s165, %s166
      %p178 = scmp.eq.s32.totalorder %s25, 1
      %p179 = por %p177, %p178
      %p181 = scmp.ne.s32.totalorder %s166, %s180
      %p182 = scmp.eq.s32.totalorder %s25, 0
      %p183 = por %p181, %p182
      %s185 = sadd.s32 %s184, 1
      %p188 = scmp.eq.s32.totalorder %s19, 1
      %p189 = scmp.ne.s32.totalorder %s184, %s186
      %p190 = scmp.eq.s32.totalorder %s19, 0
      %p191 = por %p189, %p190
      %p192 = scmp.ne.s32.totalorder %s184, %s186
      %p193 = scmp.eq.s32.totalorder %s24, 1
      %p194 = por %p192, %p193
      %p195 = scmp.ne.s32.totalorder %s186, %s187
      %p196 = scmp.eq.s32.totalorder %s24, 0
      %p197 = por %p195, %p196
      %p198 = scmp.ne.s32.totalorder %s186, %s187
      %p199 = scmp.eq.s32.totalorder %s25, 1
      %p200 = por %p198, %p199
      %p202 = scmp.ne.s32.totalorder %s187, %s201
      %p203 = scmp.eq.s32.totalorder %s25, 0
      %p204 = por %p202, %p203
      %s205 = ssub.s32 %s19, %s26
      %p206 = scmp.eq.s32.totalorder %s205, 0
      %s208 = sadd.s32 %s207, 1
      %s209 = scalar_select %p206, %s207, %s208
      %p212 = pneg %p206
      %p213 = scmp.eq.s32.totalorder %s19, 1
      %p214 = por %p212, %p213
      %p215 = scmp.ne.s32.totalorder %s207, %s210
      %p216 = scmp.eq.s32.totalorder %s19, 0
      %p217 = por %p215, %p216
      %p218 = scmp.ne.s32.totalorder %s207, %s210
      %p219 = scmp.eq.s32.totalorder %s24, 1
      %p220 = por %p218, %p219
      %p221 = scmp.ne.s32.totalorder %s210, %s211
      %p222 = scmp.eq.s32.totalorder %s24, 0
      %p223 = por %p221, %p222
      %p224 = scmp.ne.s32.totalorder %s210, %s211
      %p225 = scmp.eq.s32.totalorder %s25, 1
      %p226 = por %p224, %p225
      %p228 = scmp.ne.s32.totalorder %s211, %s227
      %p229 = scmp.eq.s32.totalorder %s25, 0
      %p230 = por %p228, %p229
      %p231 = scmp.le.s32.totalorder 1, %s19
      %p232 = scmp.lt.s32.totalorder %s19, 3
      %p233 = pnand %p231, %p232
      %p234 = pneg %p233
      // Predicated region
      $region9: #{tpu_custom_call.1} parent=5 // pred_check
        _
      $region10: #{tpu_custom_call.1} parent=5 // pred_check_branch
        %236 = sbr.rel (%p233) target = $region12
      $region11: #{tpu_custom_call.1} parent=5 // pred_region
        %s237 = ssub.s32 %s19, 1
        // Predicated region
        $region13: #{tpu_custom_call.1} parent=11 // pred_check
          %p238 = pneg %p92
        $region14: #{tpu_custom_call.1} parent=11 // pred_check_branch
          %240 = sbr.rel (%p238) target = $region16
        $region15: #{tpu_custom_call.1} parent=11 // pred_region
          _
        $region16: #{tpu_custom_call.1} parent=11 // pred_fallthru
          _
        // Predicated region
        $region17: #{tpu_custom_call.1} parent=11 // pred_check
          %p241 = pneg %p113
        $region18: #{tpu_custom_call.1} parent=11 // pred_check_branch
          %243 = sbr.rel (%p241) target = $region20
        $region19: #{tpu_custom_call.1} parent=11 // pred_region
          _
        $region20: #{tpu_custom_call.1} parent=11 // pred_fallthru
          _
        // Predicated region
        $region21: #{tpu_custom_call.1} parent=11 // pred_check
          %p244 = pneg %p134
        $region22: #{tpu_custom_call.1} parent=11 // pred_check_branch
          %246 = sbr.rel (%p244) target = $region24
        $region23: #{tpu_custom_call.1} parent=11 // pred_region
          _
        $region24: #{tpu_custom_call.1} parent=11 // pred_fallthru
          _
        // Predicated region
        $region25: #{tpu_custom_call.1} parent=11 // pred_check
          %p247 = pneg %p155
        $region26: #{tpu_custom_call.1} parent=11 // pred_check_branch
          %249 = sbr.rel (%p247) target = $region28
        $region27: #{tpu_custom_call.1} parent=11 // pred_region
          _
        $region28: #{tpu_custom_call.1} parent=11 // pred_fallthru
          _
        // Predicated region
        $region29: #{tpu_custom_call.1} parent=11 // pred_check
          %p250 = pneg %p176
        $region30: #{tpu_custom_call.1} parent=11 // pred_check_branch
          %252 = sbr.rel (%p250) target = $region32
        $region31: #{tpu_custom_call.1} parent=11 // pred_region
          _
        $region32: #{tpu_custom_call.1} parent=11 // pred_fallthru
          _
        // Predicated region
        $region33: #{tpu_custom_call.1} parent=11 // pred_check
          %p253 = pneg %p197
        $region34: #{tpu_custom_call.1} parent=11 // pred_check_branch
          %255 = sbr.rel (%p253) target = $region36
        $region35: #{tpu_custom_call.1} parent=11 // pred_region
          _
        $region36: #{tpu_custom_call.1} parent=11 // pred_fallthru
          _
      $region12: #{tpu_custom_call.1} parent=5 // pred_fallthru
        _
      %p256 = scmp.lt.s32.totalorder %s19, 2
      // Predicated region
      $region37: #{tpu_custom_call.1} parent=5 // pred_check
        %p257 = pneg %p256
      $region38: #{tpu_custom_call.1} parent=5 // pred_check_branch
        %259 = sbr.rel (%p257) target = $region40
      $region39: #{tpu_custom_call.1} parent=5 // pred_region
        // Predicated region
        $region41: #{tpu_custom_call.1} parent=39 // pred_check
          %p260 = pneg %p39
        $region42: #{tpu_custom_call.1} parent=39 // pred_check_branch
          %262 = sbr.rel (%p260) target = $region44
        $region43: #{tpu_custom_call.1} parent=39 // pred_region
          %s263 = smul.u32 16, %s19
          %p264 = scmp.lt.s32.totalorder %s263, 31
          %s265 = scalar_select %p264, %s263, 31
          %s266 = smul.addr %s265, 8
          %s267 = scalar_lea.vmem %s1, %s266
          %s268 = smul.u32 16, %s19
        $region44: #{tpu_custom_call.1} parent=39 // pred_fallthru
          _
        // Predicated region
        $region45: #{tpu_custom_call.1} parent=39 // pred_check
          %p269 = pneg %p65
        $region46: #{tpu_custom_call.1} parent=39 // pred_check_branch
          %271 = sbr.rel (%p269) target = $region48
        $region47: #{tpu_custom_call.1} parent=39 // pred_region
          %s272 = smul.u32 16, %s19
          %p273 = scmp.lt.s32.totalorder %s272, 31
          %s274 = scalar_select %p273, %s272, 31
          %s275 = smul.addr %s274, 8
          %s276 = scalar_lea.vmem %s2, %s275
          %s277 = smul.u32 16, %s19
        $region48: #{tpu_custom_call.1} parent=39 // pred_fallthru
          _
      $region40: #{tpu_custom_call.1} parent=5 // pred_fallthru
        _
      %p278 = scmp.le.s32.totalorder 1, %s19
      %p279 = scmp.lt.s32.totalorder %s19, 3
      %p280 = pnand %p278, %p279
      %p281 = pneg %p280
      // Predicated region
      $region49: #{tpu_custom_call.1} parent=5 // pred_check
        _
      $region50: #{tpu_custom_call.1} parent=5 // pred_check_branch
        %283 = sbr.rel (%p280) target = $region52
      $region51: #{tpu_custom_call.1} parent=5 // pred_region
        %s284 = ssub.s32 %s19, 1
        %s285 = smul.u32 16, %s24
        %p286 = scmp.lt.s32.totalorder %s285, 31
        %s287 = scalar_select %p286, %s285, 31
        %s288 = smul.addr %s287, 8
        %s289 = scalar_lea.vmem %s1, %s288
        %p290 = pneg %p45
        %p291 = pneg %p42
        %s292 = smul.u32 16, %s24
        %p293 = scmp.lt.s32.totalorder %s292, 31
        %s294 = scalar_select %p293, %s292, 31
        %s295 = smul.addr %s294, 8
        %s296 = scalar_lea.vmem %s2, %s295
        %p297 = pneg %p71
        %p298 = pneg %p68
        %p299 = pneg %p92
        %p300 = pneg %p89
        %p301 = pneg %p113
        %p302 = pneg %p110
        %p303 = pneg %p134
        %p304 = pneg %p131
        %p305 = pneg %p155
        %p306 = pneg %p152
        %p307 = pneg %p176
        %p308 = pneg %p173
        %p309 = pneg %p197
        %p310 = pneg %p194
        %p311 = pneg %p223
        %p312 = pneg %p220
        %s313 = sand.u32 %s210, 1
        %s314 = scalar_lea.sflag [#allocation5], %s313
        %s315 = sand.u32 %s210, 1
        %s316 = smul.addr %s315, 128
        %s317 = scalar_lea.vmem [#allocation4], %s316
        %s318 = smul.u32 16, %s24
        %p319 = scmp.lt.s32.totalorder %s318, 31
        %s320 = scalar_select %p319, %s318, 31
        %s321 = smul.addr %s320, 8
        %s322 = scalar_lea.vmem %s1, %s321
        %s323 = smul.u32 16, %s24
        %s324 = smul.u32 16, %s24
        %p325 = scmp.lt.s32.totalorder %s324, 31
        %s326 = scalar_select %p325, %s324, 31
        %s327 = smul.addr %s326, 8
        %s328 = scalar_lea.vmem %s2, %s327
        %s329 = smul.u32 16, %s24
        %s330 = smul.u32 16, %s24
        %v331 = vld [vmem:[%s322] sm:$0xff]
        %v332 = vld [vmem:[%s322 + $0x8] sm:$0xff]
        %v333 = vld [vmem:[%s322 + $0x10] sm:$0xff]
        %v334 = vld [vmem:[%s322 + $0x18] sm:$0xff]
        %v335 = vld [vmem:[%s322 + $0x20] sm:$0xff]
        %v336 = vld [vmem:[%s322 + $0x28] sm:$0xff]
        %v337 = vld [vmem:[%s322 + $0x30] sm:$0xff]
        %v338 = vld [vmem:[%s322 + $0x38] sm:$0xff]
        %v339 = vld [vmem:[%s322 + $0x40] sm:$0xff]
        %v340 = vld [vmem:[%s322 + $0x48] sm:$0xff]
        %v341 = vld [vmem:[%s322 + $0x50] sm:$0xff]
        %v342 = vld [vmem:[%s322 + $0x58] sm:$0xff]
        %v343 = vld [vmem:[%s322 + $0x60] sm:$0xff]
        %v344 = vld [vmem:[%s322 + $0x68] sm:$0xff]
        %v345 = vld [vmem:[%s322 + $0x70] sm:$0xff]
        %v346 = vld [vmem:[%s322 + $0x78] sm:$0xff]
        %v347 = vld [vmem:[%s3] sm:$0xff]
        %v348 = vld [vmem:[%s3 + $0x8] sm:$0xff]
        %v349 = vld [vmem:[%s3 + $0x10] sm:$0xff]
        %v350 = vld [vmem:[%s3 + $0x18] sm:$0xff]
        %v351 = vld [vmem:[%s4] sm:$0x1]
        %v353 = vperm.slane %v351, 0
        %vm355 = vcmask 261120
        %v357 = vsel %vm355, %v331, 0
        %v360 = vsel %vm355, %v332, 0
        %v363 = vsel %vm355, %v333, 0
        %v366 = vsel %vm355, %v334, 0
        %v369 = vsel %vm355, %v335, 0
        %v372 = vsel %vm355, %v336, 0
        %v375 = vsel %vm355, %v337, 0
        %v378 = vsel %vm355, %v338, 0
        %v381 = vsel %vm355, %v339, 0
        %v384 = vsel %vm355, %v340, 0
        %v387 = vsel %vm355, %v341, 0
        %v390 = vsel %vm355, %v342, 0
        %v393 = vsel %vm355, %v343, 0
        %v396 = vsel %vm355, %v344, 0
        %v399 = vsel %vm355, %v345, 0
        %v402 = vsel %vm355, %v346, 0
        %404 = vmatpush.msra.mxu0 0.0
        %405 = vmatpush.msra.mxu0 0.0
        %406 = vmatpush.msra.mxu0 0.0
        %407 = vmatpush.msra.mxu0 0.0
        %408 = vmatpush.msra.mxu0 0.0
        %409 = vmatpush.msra.mxu0 0.0
        %410 = vmatpush.msra.mxu0 0.0
        %411 = vmatpush.msra.mxu0 0.0
        %412 = vmatpush.msra.mxu0 0.0
        %413 = vmatpush.msra.mxu0 0.0
        %414 = vmatpush.msra.mxu0 0.0
        %415 = vmatpush.msra.mxu0 0.0
        %416 = vmatpush.msra.mxu0 %v350
        %417 = vmatpush.msra.mxu0 %v349
        %418 = vmatpush.msra.mxu0 %v348
        %419 = vmatpush.msra.mxu0 %v347
        %420 = vmatmul.f32.gmra.mxu0 %v357
        %v421 = vpop.f32.mrf.mxu0
        %v422 = vadd.f32 %v353, %v421
        %423 = vmatmul.f32.gmra.mxu0 %v360
        %v424 = vpop.f32.mrf.mxu0
        %v425 = vadd.f32 %v353, %v424
        %426 = vmatmul.f32.gmra.mxu0 %v363
        %v427 = vpop.f32.mrf.mxu0
        %v428 = vadd.f32 %v353, %v427
        %429 = vmatmul.f32.gmra.mxu0 %v366
        %v430 = vpop.f32.mrf.mxu0
        %v431 = vadd.f32 %v353, %v430
        %432 = vmatmul.f32.gmra.mxu0 %v369
        %v433 = vpop.f32.mrf.mxu0
        %v434 = vadd.f32 %v353, %v433
        %435 = vmatmul.f32.gmra.mxu0 %v372
        %v436 = vpop.f32.mrf.mxu0
        %v437 = vadd.f32 %v353, %v436
        %438 = vmatmul.f32.gmra.mxu0 %v375
        %v439 = vpop.f32.mrf.mxu0
        %v440 = vadd.f32 %v353, %v439
        %441 = vmatmul.f32.gmra.mxu0 %v378
        %v442 = vpop.f32.mrf.mxu0
        %v443 = vadd.f32 %v353, %v442
        %444 = vmatmul.f32.gmra.mxu0 %v381
        %v445 = vpop.f32.mrf.mxu0
        %v446 = vadd.f32 %v353, %v445
        %447 = vmatmul.f32.gmra.mxu0 %v384
        %v448 = vpop.f32.mrf.mxu0
        %v449 = vadd.f32 %v353, %v448
        %450 = vmatmul.f32.gmra.mxu0 %v387
        %v451 = vpop.f32.mrf.mxu0
        %v452 = vadd.f32 %v353, %v451
        %453 = vmatmul.f32.gmra.mxu0 %v390
        %v454 = vpop.f32.mrf.mxu0
        %v455 = vadd.f32 %v353, %v454
        %456 = vmatmul.f32.gmra.mxu0 %v393
        %v457 = vpop.f32.mrf.mxu0
        %v458 = vadd.f32 %v353, %v457
        %459 = vmatmul.f32.gmra.mxu0 %v396
        %v460 = vpop.f32.mrf.mxu0
        %v461 = vadd.f32 %v353, %v460
        %462 = vmatmul.f32.gmra.mxu0 %v399
        %v463 = vpop.f32.mrf.mxu0
        %v464 = vadd.f32 %v353, %v463
        %465 = vmatmul.f32.gmra.mxu0 %v402
        %v466 = vpop.f32.mrf.mxu0
        %v467 = vadd.f32 %v353, %v466
        %468 = vdwg.mxu0
        %v469 = vmul.f32 %v422, 0.5
        %v470 = vmul.f32 %v425, 0.5
        %v471 = vmul.f32 %v428, 0.5
        %v472 = vmul.f32 %v431, 0.5
        %v473 = vmul.f32 %v434, 0.5
        %v474 = vmul.f32 %v437, 0.5
        %v475 = vmul.f32 %v440, 0.5
        %v476 = vmul.f32 %v443, 0.5
        %v477 = vmul.f32 %v446, 0.5
        %v478 = vmul.f32 %v449, 0.5
        %v479 = vmul.f32 %v452, 0.5
        %v480 = vmul.f32 %v455, 0.5
        %v481 = vmul.f32 %v458, 0.5
        %v482 = vmul.f32 %v461, 0.5
        %v483 = vmul.f32 %v464, 0.5
        %v484 = vmul.f32 %v467, 0.5
        %v485 = vmul.f32 %v422, 0.70710677
        %v486 = vmul.f32 %v425, 0.70710677
        %v487 = vmul.f32 %v428, 0.70710677
        %v488 = vmul.f32 %v431, 0.70710677
        %v489 = vmul.f32 %v434, 0.70710677
        %v490 = vmul.f32 %v437, 0.70710677
        %v491 = vmul.f32 %v440, 0.70710677
        %v492 = vmul.f32 %v443, 0.70710677
        %v493 = vmul.f32 %v446, 0.70710677
        %v494 = vmul.f32 %v449, 0.70710677
        %v495 = vmul.f32 %v452, 0.70710677
        %v496 = vmul.f32 %v455, 0.70710677
        %v497 = vmul.f32 %v458, 0.70710677
        %v498 = vmul.f32 %v461, 0.70710677
        %v499 = vmul.f32 %v464, 0.70710677
        %v500 = vmul.f32 %v467, 0.70710677
        %v501 = vmul.f32 %v485, %v485
        %v502 = vmin.f32 16.0, %v501
        %v503 = vmul.f32 %v502, 2.1237322e-06
        %v504 = vadd.f32 %v503, 0.00028619796
        %v505 = vmul.f32 %v502, %v504
        %v506 = vadd.f32 %v505, 0.0036580483
        %v507 = vmul.f32 %v502, %v506
        %v508 = vadd.f32 %v507, 0.05243302
        %v509 = vmul.f32 %v502, %v508
        %v510 = vadd.f32 %v509, 0.18741608
        %v511 = vmul.f32 %v502, %v510
        %v512 = vadd.f32 %v511, 1.1283791
        %v513 = vmul.f32 %v485, %v512
        %v514 = vmul.f32 %v502, 3.8918573e-05
        %v515 = vadd.f32 %v514, 0.001143296
        %v516 = vmul.f32 %v502, %v515
        %v517 = vadd.f32 %v516, 0.014752088
        %v518 = vmul.f32 %v502, %v517
        %v519 = vadd.f32 %v518, 0.112945676
        %v520 = vmul.f32 %v502, %v519
        %v521 = vadd.f32 %v520, 0.4994258
        %v522 = vmul.f32 %v502, %v521
        %v523 = vadd.f32 %v522, 1.0
        %v524 = vrcp.pop %v523
        %v525 = vmul.f32 %v523, %v524
        %v526 = vsub.f32 1.0, %v525
        %v527 = vmul.f32 %v524, %v526
        %v528 = vadd.f32 %v524, %v527
        %vm529 = vweird.f32 %v523
        %vm530 = vweird.f32 %v524
        %vm531 = vmor %vm529, %vm530
        %v532 = vsel %vm531, %v524, %v528
        %v533 = vand.u32 2147483647, %v523
        %vm534 = vcmp.eq.f32.partialorder %v533, 8.507059e+37
        %v535 = vand.u32 %v523, 2147483648
        %v536 = vor.u32 1.1754944e-38, %v535
        %v537 = vsel %vm534, %v536, %v532
        %v538 = vmul.f32 %v513, %v537
        %v539 = vmin.f32 %v538, 1.0
        %v540 = vmax.f32 %v539, -1.0
        %v541 = vmul.f32 %v486, %v486
        %v542 = vmin.f32 16.0, %v541
        %v543 = vmul.f32 %v542, 2.1237322e-06
        %v544 = vadd.f32 %v543, 0.00028619796
        %v545 = vmul.f32 %v542, %v544
        %v546 = vadd.f32 %v545, 0.0036580483
        %v547 = vmul.f32 %v542, %v546
        %v548 = vadd.f32 %v547, 0.05243302
        %v549 = vmul.f32 %v542, %v548
        %v550 = vadd.f32 %v549, 0.18741608
        %v551 = vmul.f32 %v542, %v550
        %v552 = vadd.f32 %v551, 1.1283791
        %v553 = vmul.f32 %v486, %v552
        %v554 = vmul.f32 %v542, 3.8918573e-05
        %v555 = vadd.f32 %v554, 0.001143296
        %v556 = vmul.f32 %v542, %v555
        %v557 = vadd.f32 %v556, 0.014752088
        %v558 = vmul.f32 %v542, %v557
        %v559 = vadd.f32 %v558, 0.112945676
        %v560 = vmul.f32 %v542, %v559
        %v561 = vadd.f32 %v560, 0.4994258
        %v562 = vmul.f32 %v542, %v561
        %v563 = vadd.f32 %v562, 1.0
        %v564 = vrcp.pop %v563
        %v565 = vmul.f32 %v563, %v564
        %v566 = vsub.f32 1.0, %v565
        %v567 = vmul.f32 %v564, %v566
        %v568 = vadd.f32 %v564, %v567
        %vm569 = vweird.f32 %v563
        %vm570 = vweird.f32 %v564
        %vm571 = vmor %vm569, %vm570
        %v572 = vsel %vm571, %v564, %v568
        %v573 = vand.u32 2147483647, %v563
        %vm574 = vcmp.eq.f32.partialorder %v573, 8.507059e+37
        %v575 = vand.u32 %v563, 2147483648
        %v576 = vor.u32 1.1754944e-38, %v575
        %v577 = vsel %vm574, %v576, %v572
        %v578 = vmul.f32 %v553, %v577
        %v579 = vmin.f32 %v578, 1.0
        %v580 = vmax.f32 %v579, -1.0
        %v581 = vmul.f32 %v487, %v487
        %v582 = vmin.f32 16.0, %v581
        %v583 = vmul.f32 %v582, 2.1237322e-06
        %v584 = vadd.f32 %v583, 0.00028619796
        %v585 = vmul.f32 %v582, %v584
        %v586 = vadd.f32 %v585, 0.0036580483
        %v587 = vmul.f32 %v582, %v586
        %v588 = vadd.f32 %v587, 0.05243302
        %v589 = vmul.f32 %v582, %v588
        %v590 = vadd.f32 %v589, 0.18741608
        %v591 = vmul.f32 %v582, %v590
        %v592 = vadd.f32 %v591, 1.1283791
        %v593 = vmul.f32 %v487, %v592
        %v594 = vmul.f32 %v582, 3.8918573e-05
        %v595 = vadd.f32 %v594, 0.001143296
        %v596 = vmul.f32 %v582, %v595
        %v597 = vadd.f32 %v596, 0.014752088
        %v598 = vmul.f32 %v582, %v597
        %v599 = vadd.f32 %v598, 0.112945676
        %v600 = vmul.f32 %v582, %v599
        %v601 = vadd.f32 %v600, 0.4994258
        %v602 = vmul.f32 %v582, %v601
        %v603 = vadd.f32 %v602, 1.0
        %v604 = vrcp.pop %v603
        %v605 = vmul.f32 %v603, %v604
        %v606 = vsub.f32 1.0, %v605
        %v607 = vmul.f32 %v604, %v606
        %v608 = vadd.f32 %v604, %v607
        %vm609 = vweird.f32 %v603
        %vm610 = vweird.f32 %v604
        %vm611 = vmor %vm609, %vm610
        %v612 = vsel %vm611, %v604, %v608
        %v613 = vand.u32 2147483647, %v603
        %vm614 = vcmp.eq.f32.partialorder %v613, 8.507059e+37
        %v615 = vand.u32 %v603, 2147483648
        %v616 = vor.u32 1.1754944e-38, %v615
        %v617 = vsel %vm614, %v616, %v612
        %v618 = vmul.f32 %v593, %v617
        %v619 = vmin.f32 %v618, 1.0
        %v620 = vmax.f32 %v619, -1.0
        %v621 = vmul.f32 %v488, %v488
        %v622 = vmin.f32 16.0, %v621
        %v623 = vmul.f32 %v622, 2.1237322e-06
        %v624 = vadd.f32 %v623, 0.00028619796
        %v625 = vmul.f32 %v622, %v624
        %v626 = vadd.f32 %v625, 0.0036580483
        %v627 = vmul.f32 %v622, %v626
        %v628 = vadd.f32 %v627, 0.05243302
        %v629 = vmul.f32 %v622, %v628
        %v630 = vadd.f32 %v629, 0.18741608
        %v631 = vmul.f32 %v622, %v630
        %v632 = vadd.f32 %v631, 1.1283791
        %v633 = vmul.f32 %v488, %v632
        %v634 = vmul.f32 %v622, 3.8918573e-05
        %v635 = vadd.f32 %v634, 0.001143296
        %v636 = vmul.f32 %v622, %v635
        %v637 = vadd.f32 %v636, 0.014752088
        %v638 = vmul.f32 %v622, %v637
        %v639 = vadd.f32 %v638, 0.112945676
        %v640 = vmul.f32 %v622, %v639
        %v641 = vadd.f32 %v640, 0.4994258
        %v642 = vmul.f32 %v622, %v641
        %v643 = vadd.f32 %v642, 1.0
        %v644 = vrcp.pop %v643
        %v645 = vmul.f32 %v643, %v644
        %v646 = vsub.f32 1.0, %v645
        %v647 = vmul.f32 %v644, %v646
        %v648 = vadd.f32 %v644, %v647
        %vm649 = vweird.f32 %v643
        %vm650 = vweird.f32 %v644
        %vm651 = vmor %vm649, %vm650
        %v652 = vsel %vm651, %v644, %v648
        %v653 = vand.u32 2147483647, %v643
        %vm654 = vcmp.eq.f32.partialorder %v653, 8.507059e+37
        %v655 = vand.u32 %v643, 2147483648
        %v656 = vor.u32 1.1754944e-38, %v655
        %v657 = vsel %vm654, %v656, %v652
        %v658 = vmul.f32 %v633, %v657
        %v659 = vmin.f32 %v658, 1.0
        %v660 = vmax.f32 %v659, -1.0
        %v661 = vmul.f32 %v489, %v489
        %v662 = vmin.f32 16.0, %v661
        %v663 = vmul.f32 %v662, 2.1237322e-06
        %v664 = vadd.f32 %v663, 0.00028619796
        %v665 = vmul.f32 %v662, %v664
        %v666 = vadd.f32 %v665, 0.0036580483
        %v667 = vmul.f32 %v662, %v666
        %v668 = vadd.f32 %v667, 0.05243302
        %v669 = vmul.f32 %v662, %v668
        %v670 = vadd.f32 %v669, 0.18741608
        %v671 = vmul.f32 %v662, %v670
        %v672 = vadd.f32 %v671, 1.1283791
        %v673 = vmul.f32 %v489, %v672
        %v674 = vmul.f32 %v662, 3.8918573e-05
        %v675 = vadd.f32 %v674, 0.001143296
        %v676 = vmul.f32 %v662, %v675
        %v677 = vadd.f32 %v676, 0.014752088
        %v678 = vmul.f32 %v662, %v677
        %v679 = vadd.f32 %v678, 0.112945676
        %v680 = vmul.f32 %v662, %v679
        %v681 = vadd.f32 %v680, 0.4994258
        %v682 = vmul.f32 %v662, %v681
        %v683 = vadd.f32 %v682, 1.0
        %v684 = vrcp.pop %v683
        %v685 = vmul.f32 %v683, %v684
        %v686 = vsub.f32 1.0, %v685
        %v687 = vmul.f32 %v684, %v686
        %v688 = vadd.f32 %v684, %v687
        %vm689 = vweird.f32 %v683
        %vm690 = vweird.f32 %v684
        %vm691 = vmor %vm689, %vm690
        %v692 = vsel %vm691, %v684, %v688
        %v693 = vand.u32 2147483647, %v683
        %vm694 = vcmp.eq.f32.partialorder %v693, 8.507059e+37
        %v695 = vand.u32 %v683, 2147483648
        %v696 = vor.u32 1.1754944e-38, %v695
        %v697 = vsel %vm694, %v696, %v692
        %v698 = vmul.f32 %v673, %v697
        %v699 = vmin.f32 %v698, 1.0
        %v700 = vmax.f32 %v699, -1.0
        %v701 = vmul.f32 %v490, %v490
        %v702 = vmin.f32 16.0, %v701
        %v703 = vmul.f32 %v702, 2.1237322e-06
        %v704 = vadd.f32 %v703, 0.00028619796
        %v705 = vmul.f32 %v702, %v704
        %v706 = vadd.f32 %v705, 0.0036580483
        %v707 = vmul.f32 %v702, %v706
        %v708 = vadd.f32 %v707, 0.05243302
        %v709 = vmul.f32 %v702, %v708
        %v710 = vadd.f32 %v709, 0.18741608
        %v711 = vmul.f32 %v702, %v710
        %v712 = vadd.f32 %v711, 1.1283791
        %v713 = vmul.f32 %v490, %v712
        %v714 = vmul.f32 %v702, 3.8918573e-05
        %v715 = vadd.f32 %v714, 0.001143296
        %v716 = vmul.f32 %v702, %v715
        %v717 = vadd.f32 %v716, 0.014752088
        %v718 = vmul.f32 %v702, %v717
        %v719 = vadd.f32 %v718, 0.112945676
        %v720 = vmul.f32 %v702, %v719
        %v721 = vadd.f32 %v720, 0.4994258
        %v722 = vmul.f32 %v702, %v721
        %v723 = vadd.f32 %v722, 1.0
        %v724 = vrcp.pop %v723
        %v725 = vmul.f32 %v723, %v724
        %v726 = vsub.f32 1.0, %v725
        %v727 = vmul.f32 %v724, %v726
        %v728 = vadd.f32 %v724, %v727
        %vm729 = vweird.f32 %v723
        %vm730 = vweird.f32 %v724
        %vm731 = vmor %vm729, %vm730
        %v732 = vsel %vm731, %v724, %v728
        %v733 = vand.u32 2147483647, %v723
        %vm734 = vcmp.eq.f32.partialorder %v733, 8.507059e+37
        %v735 = vand.u32 %v723, 2147483648
        %v736 = vor.u32 1.1754944e-38, %v735
        %v737 = vsel %vm734, %v736, %v732
        %v738 = vmul.f32 %v713, %v737
        %v739 = vmin.f32 %v738, 1.0
        %v740 = vmax.f32 %v739, -1.0
        %v741 = vmul.f32 %v491, %v491
        %v742 = vmin.f32 16.0, %v741
        %v743 = vmul.f32 %v742, 2.1237322e-06
        %v744 = vadd.f32 %v743, 0.00028619796
        %v745 = vmul.f32 %v742, %v744
        %v746 = vadd.f32 %v745, 0.0036580483
        %v747 = vmul.f32 %v742, %v746
        %v748 = vadd.f32 %v747, 0.05243302
        %v749 = vmul.f32 %v742, %v748
        %v750 = vadd.f32 %v749, 0.18741608
        %v751 = vmul.f32 %v742, %v750
        %v752 = vadd.f32 %v751, 1.1283791
        %v753 = vmul.f32 %v491, %v752
        %v754 = vmul.f32 %v742, 3.8918573e-05
        %v755 = vadd.f32 %v754, 0.001143296
        %v756 = vmul.f32 %v742, %v755
        %v757 = vadd.f32 %v756, 0.014752088
        %v758 = vmul.f32 %v742, %v757
        %v759 = vadd.f32 %v758, 0.112945676
        %v760 = vmul.f32 %v742, %v759
        %v761 = vadd.f32 %v760, 0.4994258
        %v762 = vmul.f32 %v742, %v761
        %v763 = vadd.f32 %v762, 1.0
        %v764 = vrcp.pop %v763
        %v765 = vmul.f32 %v763, %v764
        %v766 = vsub.f32 1.0, %v765
        %v767 = vmul.f32 %v764, %v766
        %v768 = vadd.f32 %v764, %v767
        %vm769 = vweird.f32 %v763
        %vm770 = vweird.f32 %v764
        %vm771 = vmor %vm769, %vm770
        %v772 = vsel %vm771, %v764, %v768
        %v773 = vand.u32 2147483647, %v763
        %vm774 = vcmp.eq.f32.partialorder %v773, 8.507059e+37
        %v775 = vand.u32 %v763, 2147483648
        %v776 = vor.u32 1.1754944e-38, %v775
        %v777 = vsel %vm774, %v776, %v772
        %v778 = vmul.f32 %v753, %v777
        %v779 = vmin.f32 %v778, 1.0
        %v780 = vmax.f32 %v779, -1.0
        %v781 = vmul.f32 %v492, %v492
        %v782 = vmin.f32 16.0, %v781
        %v783 = vmul.f32 %v782, 2.1237322e-06
        %v784 = vadd.f32 %v783, 0.00028619796
        %v785 = vmul.f32 %v782, %v784
        %v786 = vadd.f32 %v785, 0.0036580483
        %v787 = vmul.f32 %v782, %v786
        %v788 = vadd.f32 %v787, 0.05243302
        %v789 = vmul.f32 %v782, %v788
        %v790 = vadd.f32 %v789, 0.18741608
        %v791 = vmul.f32 %v782, %v790
        %v792 = vadd.f32 %v791, 1.1283791
        %v793 = vmul.f32 %v492, %v792
        %v794 = vmul.f32 %v782, 3.8918573e-05
        %v795 = vadd.f32 %v794, 0.001143296
        %v796 = vmul.f32 %v782, %v795
        %v797 = vadd.f32 %v796, 0.014752088
        %v798 = vmul.f32 %v782, %v797
        %v799 = vadd.f32 %v798, 0.112945676
        %v800 = vmul.f32 %v782, %v799
        %v801 = vadd.f32 %v800, 0.4994258
        %v802 = vmul.f32 %v782, %v801
        %v803 = vadd.f32 %v802, 1.0
        %v804 = vrcp.pop %v803
        %v805 = vmul.f32 %v803, %v804
        %v806 = vsub.f32 1.0, %v805
        %v807 = vmul.f32 %v804, %v806
        %v808 = vadd.f32 %v804, %v807
        %vm809 = vweird.f32 %v803
        %vm810 = vweird.f32 %v804
        %vm811 = vmor %vm809, %vm810
        %v812 = vsel %vm811, %v804, %v808
        %v813 = vand.u32 2147483647, %v803
        %vm814 = vcmp.eq.f32.partialorder %v813, 8.507059e+37
        %v815 = vand.u32 %v803, 2147483648
        %v816 = vor.u32 1.1754944e-38, %v815
        %v817 = vsel %vm814, %v816, %v812
        %v818 = vmul.f32 %v793, %v817
        %v819 = vmin.f32 %v818, 1.0
        %v820 = vmax.f32 %v819, -1.0
        %v821 = vmul.f32 %v493, %v493
        %v822 = vmin.f32 16.0, %v821
        %v823 = vmul.f32 %v822, 2.1237322e-06
        %v824 = vadd.f32 %v823, 0.00028619796
        %v825 = vmul.f32 %v822, %v824
        %v826 = vadd.f32 %v825, 0.0036580483
        %v827 = vmul.f32 %v822, %v826
        %v828 = vadd.f32 %v827, 0.05243302
        %v829 = vmul.f32 %v822, %v828
        %v830 = vadd.f32 %v829, 0.18741608
        %v831 = vmul.f32 %v822, %v830
        %v832 = vadd.f32 %v831, 1.1283791
        %v833 = vmul.f32 %v493, %v832
        %v834 = vmul.f32 %v822, 3.8918573e-05
        %v835 = vadd.f32 %v834, 0.001143296
        %v836 = vmul.f32 %v822, %v835
        %v837 = vadd.f32 %v836, 0.014752088
        %v838 = vmul.f32 %v822, %v837
        %v839 = vadd.f32 %v838, 0.112945676
        %v840 = vmul.f32 %v822, %v839
        %v841 = vadd.f32 %v840, 0.4994258
        %v842 = vmul.f32 %v822, %v841
        %v843 = vadd.f32 %v842, 1.0
        %v844 = vrcp.pop %v843
        %v845 = vmul.f32 %v843, %v844
        %v846 = vsub.f32 1.0, %v845
        %v847 = vmul.f32 %v844, %v846
        %v848 = vadd.f32 %v844, %v847
        %vm849 = vweird.f32 %v843
        %vm850 = vweird.f32 %v844
        %vm851 = vmor %vm849, %vm850
        %v852 = vsel %vm851, %v844, %v848
        %v853 = vand.u32 2147483647, %v843
        %vm854 = vcmp.eq.f32.partialorder %v853, 8.507059e+37
        %v855 = vand.u32 %v843, 2147483648
        %v856 = vor.u32 1.1754944e-38, %v855
        %v857 = vsel %vm854, %v856, %v852
        %v858 = vmul.f32 %v833, %v857
        %v859 = vmin.f32 %v858, 1.0
        %v860 = vmax.f32 %v859, -1.0
        %v861 = vmul.f32 %v494, %v494
        %v862 = vmin.f32 16.0, %v861
        %v863 = vmul.f32 %v862, 2.1237322e-06
        %v864 = vadd.f32 %v863, 0.00028619796
        %v865 = vmul.f32 %v862, %v864
        %v866 = vadd.f32 %v865, 0.0036580483
        %v867 = vmul.f32 %v862, %v866
        %v868 = vadd.f32 %v867, 0.05243302
        %v869 = vmul.f32 %v862, %v868
        %v870 = vadd.f32 %v869, 0.18741608
        %v871 = vmul.f32 %v862, %v870
        %v872 = vadd.f32 %v871, 1.1283791
        %v873 = vmul.f32 %v494, %v872
        %v874 = vmul.f32 %v862, 3.8918573e-05
        %v875 = vadd.f32 %v874, 0.001143296
        %v876 = vmul.f32 %v862, %v875
        %v877 = vadd.f32 %v876, 0.014752088
        %v878 = vmul.f32 %v862, %v877
        %v879 = vadd.f32 %v878, 0.112945676
        %v880 = vmul.f32 %v862, %v879
        %v881 = vadd.f32 %v880, 0.4994258
        %v882 = vmul.f32 %v862, %v881
        %v883 = vadd.f32 %v882, 1.0
        %v884 = vrcp.pop %v883
        %v885 = vmul.f32 %v883, %v884
        %v886 = vsub.f32 1.0, %v885
        %v887 = vmul.f32 %v884, %v886
        %v888 = vadd.f32 %v884, %v887
        %vm889 = vweird.f32 %v883
        %vm890 = vweird.f32 %v884
        %vm891 = vmor %vm889, %vm890
        %v892 = vsel %vm891, %v884, %v888
        %v893 = vand.u32 2147483647, %v883
        %vm894 = vcmp.eq.f32.partialorder %v893, 8.507059e+37
        %v895 = vand.u32 %v883, 2147483648
        %v896 = vor.u32 1.1754944e-38, %v895
        %v897 = vsel %vm894, %v896, %v892
        %v898 = vmul.f32 %v873, %v897
        %v899 = vmin.f32 %v898, 1.0
        %v900 = vmax.f32 %v899, -1.0
        %v901 = vmul.f32 %v495, %v495
        %v902 = vmin.f32 16.0, %v901
        %v903 = vmul.f32 %v902, 2.1237322e-06
        %v904 = vadd.f32 %v903, 0.00028619796
        %v905 = vmul.f32 %v902, %v904
        %v906 = vadd.f32 %v905, 0.0036580483
        %v907 = vmul.f32 %v902, %v906
        %v908 = vadd.f32 %v907, 0.05243302
        %v909 = vmul.f32 %v902, %v908
        %v910 = vadd.f32 %v909, 0.18741608
        %v911 = vmul.f32 %v902, %v910
        %v912 = vadd.f32 %v911, 1.1283791
        %v913 = vmul.f32 %v495, %v912
        %v914 = vmul.f32 %v902, 3.8918573e-05
        %v915 = vadd.f32 %v914, 0.001143296
        %v916 = vmul.f32 %v902, %v915
        %v917 = vadd.f32 %v916, 0.014752088
        %v918 = vmul.f32 %v902, %v917
        %v919 = vadd.f32 %v918, 0.112945676
        %v920 = vmul.f32 %v902, %v919
        %v921 = vadd.f32 %v920, 0.4994258
        %v922 = vmul.f32 %v902, %v921
        %v923 = vadd.f32 %v922, 1.0
        %v924 = vrcp.pop %v923
        %v925 = vmul.f32 %v923, %v924
        %v926 = vsub.f32 1.0, %v925
        %v927 = vmul.f32 %v924, %v926
        %v928 = vadd.f32 %v924, %v927
        %vm929 = vweird.f32 %v923
        %vm930 = vweird.f32 %v924
        %vm931 = vmor %vm929, %vm930
        %v932 = vsel %vm931, %v924, %v928
        %v933 = vand.u32 2147483647, %v923
        %vm934 = vcmp.eq.f32.partialorder %v933, 8.507059e+37
        %v935 = vand.u32 %v923, 2147483648
        %v936 = vor.u32 1.1754944e-38, %v935
        %v937 = vsel %vm934, %v936, %v932
        %v938 = vmul.f32 %v913, %v937
        %v939 = vmin.f32 %v938, 1.0
        %v940 = vmax.f32 %v939, -1.0
        %v941 = vmul.f32 %v496, %v496
        %v942 = vmin.f32 16.0, %v941
        %v943 = vmul.f32 %v942, 2.1237322e-06
        %v944 = vadd.f32 %v943, 0.00028619796
        %v945 = vmul.f32 %v942, %v944
        %v946 = vadd.f32 %v945, 0.0036580483
        %v947 = vmul.f32 %v942, %v946
        %v948 = vadd.f32 %v947, 0.05243302
        %v949 = vmul.f32 %v942, %v948
        %v950 = vadd.f32 %v949, 0.18741608
        %v951 = vmul.f32 %v942, %v950
        %v952 = vadd.f32 %v951, 1.1283791
        %v953 = vmul.f32 %v496, %v952
        %v954 = vmul.f32 %v942, 3.8918573e-05
        %v955 = vadd.f32 %v954, 0.001143296
        %v956 = vmul.f32 %v942, %v955
        %v957 = vadd.f32 %v956, 0.014752088
        %v958 = vmul.f32 %v942, %v957
        %v959 = vadd.f32 %v958, 0.112945676
        %v960 = vmul.f32 %v942, %v959
        %v961 = vadd.f32 %v960, 0.4994258
        %v962 = vmul.f32 %v942, %v961
        %v963 = vadd.f32 %v962, 1.0
        %v964 = vrcp.pop %v963
        %v965 = vmul.f32 %v963, %v964
        %v966 = vsub.f32 1.0, %v965
        %v967 = vmul.f32 %v964, %v966
        %v968 = vadd.f32 %v964, %v967
        %vm969 = vweird.f32 %v963
        %vm970 = vweird.f32 %v964
        %vm971 = vmor %vm969, %vm970
        %v972 = vsel %vm971, %v964, %v968
        %v973 = vand.u32 2147483647, %v963
        %vm974 = vcmp.eq.f32.partialorder %v973, 8.507059e+37
        %v975 = vand.u32 %v963, 2147483648
        %v976 = vor.u32 1.1754944e-38, %v975
        %v977 = vsel %vm974, %v976, %v972
        %v978 = vmul.f32 %v953, %v977
        %v979 = vmin.f32 %v978, 1.0
        %v980 = vmax.f32 %v979, -1.0
        %v981 = vmul.f32 %v497, %v497
        %v982 = vmin.f32 16.0, %v981
        %v983 = vmul.f32 %v982, 2.1237322e-06
        %v984 = vadd.f32 %v983, 0.00028619796
        %v985 = vmul.f32 %v982, %v984
        %v986 = vadd.f32 %v985, 0.0036580483
        %v987 = vmul.f32 %v982, %v986
        %v988 = vadd.f32 %v987, 0.05243302
        %v989 = vmul.f32 %v982, %v988
        %v990 = vadd.f32 %v989, 0.18741608
        %v991 = vmul.f32 %v982, %v990
        %v992 = vadd.f32 %v991, 1.1283791
        %v993 = vmul.f32 %v497, %v992
        %v994 = vmul.f32 %v982, 3.8918573e-05
        %v995 = vadd.f32 %v994, 0.001143296
        %v996 = vmul.f32 %v982, %v995
        %v997 = vadd.f32 %v996, 0.014752088
        %v998 = vmul.f32 %v982, %v997
        %v999 = vadd.f32 %v998, 0.112945676
        %v1000 = vmul.f32 %v982, %v999
        %v1001 = vadd.f32 %v1000, 0.4994258
        %v1002 = vmul.f32 %v982, %v1001
        %v1003 = vadd.f32 %v1002, 1.0
        %v1004 = vrcp.pop %v1003
        %v1005 = vmul.f32 %v1003, %v1004
        %v1006 = vsub.f32 1.0, %v1005
        %v1007 = vmul.f32 %v1004, %v1006
        %v1008 = vadd.f32 %v1004, %v1007
        %vm1009 = vweird.f32 %v1003
        %vm1010 = vweird.f32 %v1004
        %vm1011 = vmor %vm1009, %vm1010
        %v1012 = vsel %vm1011, %v1004, %v1008
        %v1013 = vand.u32 2147483647, %v1003
        %vm1014 = vcmp.eq.f32.partialorder %v1013, 8.507059e+37
        %v1015 = vand.u32 %v1003, 2147483648
        %v1016 = vor.u32 1.1754944e-38, %v1015
        %v1017 = vsel %vm1014, %v1016, %v1012
        %v1018 = vmul.f32 %v993, %v1017
        %v1019 = vmin.f32 %v1018, 1.0
        %v1020 = vmax.f32 %v1019, -1.0
        %v1021 = vmul.f32 %v498, %v498
        %v1022 = vmin.f32 16.0, %v1021
        %v1023 = vmul.f32 %v1022, 2.1237322e-06
        %v1024 = vadd.f32 %v1023, 0.00028619796
        %v1025 = vmul.f32 %v1022, %v1024
        %v1026 = vadd.f32 %v1025, 0.0036580483
        %v1027 = vmul.f32 %v1022, %v1026
        %v1028 = vadd.f32 %v1027, 0.05243302
        %v1029 = vmul.f32 %v1022, %v1028
        %v1030 = vadd.f32 %v1029, 0.18741608
        %v1031 = vmul.f32 %v1022, %v1030
        %v1032 = vadd.f32 %v1031, 1.1283791
        %v1033 = vmul.f32 %v498, %v1032
        %v1034 = vmul.f32 %v1022, 3.8918573e-05
        %v1035 = vadd.f32 %v1034, 0.001143296
        %v1036 = vmul.f32 %v1022, %v1035
        %v1037 = vadd.f32 %v1036, 0.014752088
        %v1038 = vmul.f32 %v1022, %v1037
        %v1039 = vadd.f32 %v1038, 0.112945676
        %v1040 = vmul.f32 %v1022, %v1039
        %v1041 = vadd.f32 %v1040, 0.4994258
        %v1042 = vmul.f32 %v1022, %v1041
        %v1043 = vadd.f32 %v1042, 1.0
        %v1044 = vrcp.pop %v1043
        %v1045 = vmul.f32 %v1043, %v1044
        %v1046 = vsub.f32 1.0, %v1045
        %v1047 = vmul.f32 %v1044, %v1046
        %v1048 = vadd.f32 %v1044, %v1047
        %vm1049 = vweird.f32 %v1043
        %vm1050 = vweird.f32 %v1044
        %vm1051 = vmor %vm1049, %vm1050
        %v1052 = vsel %vm1051, %v1044, %v1048
        %v1053 = vand.u32 2147483647, %v1043
        %vm1054 = vcmp.eq.f32.partialorder %v1053, 8.507059e+37
        %v1055 = vand.u32 %v1043, 2147483648
        %v1056 = vor.u32 1.1754944e-38, %v1055
        %v1057 = vsel %vm1054, %v1056, %v1052
        %v1058 = vmul.f32 %v1033, %v1057
        %v1059 = vmin.f32 %v1058, 1.0
        %v1060 = vmax.f32 %v1059, -1.0
        %v1061 = vmul.f32 %v499, %v499
        %v1062 = vmin.f32 16.0, %v1061
        %v1063 = vmul.f32 %v1062, 2.1237322e-06
        %v1064 = vadd.f32 %v1063, 0.00028619796
        %v1065 = vmul.f32 %v1062, %v1064
        %v1066 = vadd.f32 %v1065, 0.0036580483
        %v1067 = vmul.f32 %v1062, %v1066
        %v1068 = vadd.f32 %v1067, 0.05243302
        %v1069 = vmul.f32 %v1062, %v1068
        %v1070 = vadd.f32 %v1069, 0.18741608
        %v1071 = vmul.f32 %v1062, %v1070
        %v1072 = vadd.f32 %v1071, 1.1283791
        %v1073 = vmul.f32 %v499, %v1072
        %v1074 = vmul.f32 %v1062, 3.8918573e-05
        %v1075 = vadd.f32 %v1074, 0.001143296
        %v1076 = vmul.f32 %v1062, %v1075
        %v1077 = vadd.f32 %v1076, 0.014752088
        %v1078 = vmul.f32 %v1062, %v1077
        %v1079 = vadd.f32 %v1078, 0.112945676
        %v1080 = vmul.f32 %v1062, %v1079
        %v1081 = vadd.f32 %v1080, 0.4994258
        %v1082 = vmul.f32 %v1062, %v1081
        %v1083 = vadd.f32 %v1082, 1.0
        %v1084 = vrcp.pop %v1083
        %v1085 = vmul.f32 %v1083, %v1084
        %v1086 = vsub.f32 1.0, %v1085
        %v1087 = vmul.f32 %v1084, %v1086
        %v1088 = vadd.f32 %v1084, %v1087
        %vm1089 = vweird.f32 %v1083
        %vm1090 = vweird.f32 %v1084
        %vm1091 = vmor %vm1089, %vm1090
        %v1092 = vsel %vm1091, %v1084, %v1088
        %v1093 = vand.u32 2147483647, %v1083
        %vm1094 = vcmp.eq.f32.partialorder %v1093, 8.507059e+37
        %v1095 = vand.u32 %v1083, 2147483648
        %v1096 = vor.u32 1.1754944e-38, %v1095
        %v1097 = vsel %vm1094, %v1096, %v1092
        %v1098 = vmul.f32 %v1073, %v1097
        %v1099 = vmin.f32 %v1098, 1.0
        %v1100 = vmax.f32 %v1099, -1.0
        %v1101 = vmul.f32 %v500, %v500
        %v1102 = vmin.f32 16.0, %v1101
        %v1103 = vmul.f32 %v1102, 2.1237322e-06
        %v1104 = vadd.f32 %v1103, 0.00028619796
        %v1105 = vmul.f32 %v1102, %v1104
        %v1106 = vadd.f32 %v1105, 0.0036580483
        %v1107 = vmul.f32 %v1102, %v1106
        %v1108 = vadd.f32 %v1107, 0.05243302
        %v1109 = vmul.f32 %v1102, %v1108
        %v1110 = vadd.f32 %v1109, 0.18741608
        %v1111 = vmul.f32 %v1102, %v1110
        %v1112 = vadd.f32 %v1111, 1.1283791
        %v1113 = vmul.f32 %v500, %v1112
        %v1114 = vmul.f32 %v1102, 3.8918573e-05
        %v1115 = vadd.f32 %v1114, 0.001143296
        %v1116 = vmul.f32 %v1102, %v1115
        %v1117 = vadd.f32 %v1116, 0.014752088
        %v1118 = vmul.f32 %v1102, %v1117
        %v1119 = vadd.f32 %v1118, 0.112945676
        %v1120 = vmul.f32 %v1102, %v1119
        %v1121 = vadd.f32 %v1120, 0.4994258
        %v1122 = vmul.f32 %v1102, %v1121
        %v1123 = vadd.f32 %v1122, 1.0
        %v1124 = vrcp.pop %v1123
        %v1125 = vmul.f32 %v1123, %v1124
        %v1126 = vsub.f32 1.0, %v1125
        %v1127 = vmul.f32 %v1124, %v1126
        %v1128 = vadd.f32 %v1124, %v1127
        %vm1129 = vweird.f32 %v1123
        %vm1130 = vweird.f32 %v1124
        %vm1131 = vmor %vm1129, %vm1130
        %v1132 = vsel %vm1131, %v1124, %v1128
        %v1133 = vand.u32 2147483647, %v1123
        %vm1134 = vcmp.eq.f32.partialorder %v1133, 8.507059e+37
        %v1135 = vand.u32 %v1123, 2147483648
        %v1136 = vor.u32 1.1754944e-38, %v1135
        %v1137 = vsel %vm1134, %v1136, %v1132
        %v1138 = vmul.f32 %v1113, %v1137
        %v1139 = vmin.f32 %v1138, 1.0
        %v1140 = vmax.f32 %v1139, -1.0
        %v1141 = vadd.f32 %v540, 1.0
        %v1142 = vadd.f32 %v580, 1.0
        %v1143 = vadd.f32 %v620, 1.0
        %v1144 = vadd.f32 %v660, 1.0
        %v1145 = vadd.f32 %v700, 1.0
        %v1146 = vadd.f32 %v740, 1.0
        %v1147 = vadd.f32 %v780, 1.0
        %v1148 = vadd.f32 %v820, 1.0
        %v1149 = vadd.f32 %v860, 1.0
        %v1150 = vadd.f32 %v900, 1.0
        %v1151 = vadd.f32 %v940, 1.0
        %v1152 = vadd.f32 %v980, 1.0
        %v1153 = vadd.f32 %v1020, 1.0
        %v1154 = vadd.f32 %v1060, 1.0
        %v1155 = vadd.f32 %v1100, 1.0
        %v1156 = vadd.f32 %v1140, 1.0
        %v1157 = vmul.f32 %v469, %v1141
        %v1158 = vmul.f32 %v470, %v1142
        %v1159 = vmul.f32 %v471, %v1143
        %v1160 = vmul.f32 %v472, %v1144
        %v1161 = vmul.f32 %v473, %v1145
        %v1162 = vmul.f32 %v474, %v1146
        %v1163 = vmul.f32 %v475, %v1147
        %v1164 = vmul.f32 %v476, %v1148
        %v1165 = vmul.f32 %v477, %v1149
        %v1166 = vmul.f32 %v478, %v1150
        %v1167 = vmul.f32 %v479, %v1151
        %v1168 = vmul.f32 %v480, %v1152
        %v1169 = vmul.f32 %v481, %v1153
        %v1170 = vmul.f32 %v482, %v1154
        %v1171 = vmul.f32 %v483, %v1155
        %v1172 = vmul.f32 %v484, %v1156
        %v1173 = vld [vmem:[%s5] sm:$0xff]
        %v1174 = vld [vmem:[%s5 + $0x8] sm:$0xff]
        %v1175 = vld [vmem:[%s5 + $0x10] sm:$0xff]
        %v1176 = vld [vmem:[%s5 + $0x18] sm:$0xff]
        %v1177 = vld [vmem:[%s6] sm:$0x1]
        %v1179 = vperm.slane %v1177, 0
        %v1182 = vsel %vm355, %v1157, 0
        %v1185 = vsel %vm355, %v1158, 0
        %v1188 = vsel %vm355, %v1159, 0
        %v1191 = vsel %vm355, %v1160, 0
        %v1194 = vsel %vm355, %v1161, 0
        %v1197 = vsel %vm355, %v1162, 0
        %v1200 = vsel %vm355, %v1163, 0
        %v1203 = vsel %vm355, %v1164, 0
        %v1206 = vsel %vm355, %v1165, 0
        %v1209 = vsel %vm355, %v1166, 0
        %v1212 = vsel %vm355, %v1167, 0
        %v1215 = vsel %vm355, %v1168, 0
        %v1218 = vsel %vm355, %v1169, 0
        %v1221 = vsel %vm355, %v1170, 0
        %v1224 = vsel %vm355, %v1171, 0
        %v1227 = vsel %vm355, %v1172, 0
        %1229 = vmatpush.msra.mxu0 0.0
        %1230 = vmatpush.msra.mxu0 0.0
        %1231 = vmatpush.msra.mxu0 0.0
        %1232 = vmatpush.msra.mxu0 0.0
        %1233 = vmatpush.msra.mxu0 0.0
        %1234 = vmatpush.msra.mxu0 0.0
        %1235 = vmatpush.msra.mxu0 0.0
        %1236 = vmatpush.msra.mxu0 0.0
        %1237 = vmatpush.msra.mxu0 0.0
        %1238 = vmatpush.msra.mxu0 0.0
        %1239 = vmatpush.msra.mxu0 0.0
        %1240 = vmatpush.msra.mxu0 0.0
        %1241 = vmatpush.msra.mxu0 %v1176
        %1242 = vmatpush.msra.mxu0 %v1175
        %1243 = vmatpush.msra.mxu0 %v1174
        %1244 = vmatpush.msra.mxu0 %v1173
        %1245 = vmatmul.f32.gmra.mxu0 %v1182
        %v1246 = vpop.f32.mrf.mxu0
        %v1247 = vadd.f32 %v1179, %v1246
        %1248 = vmatmul.f32.gmra.mxu0 %v1185
        %v1249 = vpop.f32.mrf.mxu0
        %v1250 = vadd.f32 %v1179, %v1249
        %1251 = vmatmul.f32.gmra.mxu0 %v1188
        %v1252 = vpop.f32.mrf.mxu0
        %v1253 = vadd.f32 %v1179, %v1252
        %1254 = vmatmul.f32.gmra.mxu0 %v1191
        %v1255 = vpop.f32.mrf.mxu0
        %v1256 = vadd.f32 %v1179, %v1255
        %1257 = vmatmul.f32.gmra.mxu0 %v1194
        %v1258 = vpop.f32.mrf.mxu0
        %v1259 = vadd.f32 %v1179, %v1258
        %1260 = vmatmul.f32.gmra.mxu0 %v1197
        %v1261 = vpop.f32.mrf.mxu0
        %v1262 = vadd.f32 %v1179, %v1261
        %1263 = vmatmul.f32.gmra.mxu0 %v1200
        %v1264 = vpop.f32.mrf.mxu0
        %v1265 = vadd.f32 %v1179, %v1264
        %1266 = vmatmul.f32.gmra.mxu0 %v1203
        %v1267 = vpop.f32.mrf.mxu0
        %v1268 = vadd.f32 %v1179, %v1267
        %1269 = vmatmul.f32.gmra.mxu0 %v1206
        %v1270 = vpop.f32.mrf.mxu0
        %v1271 = vadd.f32 %v1179, %v1270
        %1272 = vmatmul.f32.gmra.mxu0 %v1209
        %v1273 = vpop.f32.mrf.mxu0
        %v1274 = vadd.f32 %v1179, %v1273
        %1275 = vmatmul.f32.gmra.mxu0 %v1212
        %v1276 = vpop.f32.mrf.mxu0
        %v1277 = vadd.f32 %v1179, %v1276
        %1278 = vmatmul.f32.gmra.mxu0 %v1215
        %v1279 = vpop.f32.mrf.mxu0
        %v1280 = vadd.f32 %v1179, %v1279
        %1281 = vmatmul.f32.gmra.mxu0 %v1218
        %v1282 = vpop.f32.mrf.mxu0
        %v1283 = vadd.f32 %v1179, %v1282
        %1284 = vmatmul.f32.gmra.mxu0 %v1221
        %v1285 = vpop.f32.mrf.mxu0
        %v1286 = vadd.f32 %v1179, %v1285
        %1287 = vmatmul.f32.gmra.mxu0 %v1224
        %v1288 = vpop.f32.mrf.mxu0
        %v1289 = vadd.f32 %v1179, %v1288
        %1290 = vmatmul.f32.gmra.mxu0 %v1227
        %v1291 = vpop.f32.mrf.mxu0
        %v1292 = vadd.f32 %v1179, %v1291
        %1293 = vdwg.mxu0
        %v1294 = vlaneseq
        %v1295 = vand.u32 %v1294, 127
        %vm1296 = vcmp.lt.s32.totalorder %v1295, 8
        %v1297 = vsel %vm1296, %v1247, 0.0
        %v1298 = vsel %vm1296, %v1250, 0.0
        %v1299 = vsel %vm1296, %v1253, 0.0
        %v1300 = vsel %vm1296, %v1256, 0.0
        %v1301 = vsel %vm1296, %v1259, 0.0
        %v1302 = vsel %vm1296, %v1262, 0.0
        %v1303 = vsel %vm1296, %v1265, 0.0
        %v1304 = vsel %vm1296, %v1268, 0.0
        %v1305 = vsel %vm1296, %v1271, 0.0
        %v1306 = vsel %vm1296, %v1274, 0.0
        %v1307 = vsel %vm1296, %v1277, 0.0
        %v1308 = vsel %vm1296, %v1280, 0.0
        %v1309 = vsel %vm1296, %v1283, 0.0
        %v1310 = vsel %vm1296, %v1286, 0.0
        %v1311 = vsel %vm1296, %v1289, 0.0
        %v1312 = vsel %vm1296, %v1292, 0.0
        %1313 = vadd.xlane.f32.xlu0 %v1297
        %v1314 = vpop.xlane.xlu0 %1313
        %1315 = vadd.xlane.f32.xlu0 %v1298
        %v1316 = vpop.xlane.xlu0 %1315
        %1317 = vadd.xlane.f32.xlu0 %v1299
        %v1318 = vpop.xlane.xlu0 %1317
        %1319 = vadd.xlane.f32.xlu0 %v1300
        %v1320 = vpop.xlane.xlu0 %1319
        %1321 = vadd.xlane.f32.xlu0 %v1301
        %v1322 = vpop.xlane.xlu0 %1321
        %1323 = vadd.xlane.f32.xlu0 %v1302
        %v1324 = vpop.xlane.xlu0 %1323
        %1325 = vadd.xlane.f32.xlu0 %v1303
        %v1326 = vpop.xlane.xlu0 %1325
        %1327 = vadd.xlane.f32.xlu0 %v1304
        %v1328 = vpop.xlane.xlu0 %1327
        %1329 = vadd.xlane.f32.xlu0 %v1305
        %v1330 = vpop.xlane.xlu0 %1329
        %1331 = vadd.xlane.f32.xlu0 %v1306
        %v1332 = vpop.xlane.xlu0 %1331
        %1333 = vadd.xlane.f32.xlu0 %v1307
        %v1334 = vpop.xlane.xlu0 %1333
        %1335 = vadd.xlane.f32.xlu0 %v1308
        %v1336 = vpop.xlane.xlu0 %1335
        %1337 = vadd.xlane.f32.xlu0 %v1309
        %v1338 = vpop.xlane.xlu0 %1337
        %1339 = vadd.xlane.f32.xlu0 %v1310
        %v1340 = vpop.xlane.xlu0 %1339
        %1341 = vadd.xlane.f32.xlu0 %v1311
        %v1342 = vpop.xlane.xlu0 %1341
        %1343 = vadd.xlane.f32.xlu0 %v1312
        %v1344 = vpop.xlane.xlu0 %1343
        %v1345 = vmul.f32 %v1314, 0.125
        %v1346 = vmul.f32 %v1316, 0.125
        %v1347 = vmul.f32 %v1318, 0.125
        %v1348 = vmul.f32 %v1320, 0.125
        %v1349 = vmul.f32 %v1322, 0.125
        %v1350 = vmul.f32 %v1324, 0.125
        %v1351 = vmul.f32 %v1326, 0.125
        %v1352 = vmul.f32 %v1328, 0.125
        %v1353 = vmul.f32 %v1330, 0.125
        %v1354 = vmul.f32 %v1332, 0.125
        %v1355 = vmul.f32 %v1334, 0.125
        %v1356 = vmul.f32 %v1336, 0.125
        %v1357 = vmul.f32 %v1338, 0.125
        %v1358 = vmul.f32 %v1340, 0.125
        %v1359 = vmul.f32 %v1342, 0.125
        %v1360 = vmul.f32 %v1344, 0.125
        %v1361 = vmul.f32 %v1297, %v1297
        %v1362 = vmul.f32 %v1298, %v1298
        %v1363 = vmul.f32 %v1299, %v1299
        %v1364 = vmul.f32 %v1300, %v1300
        %v1365 = vmul.f32 %v1301, %v1301
        %v1366 = vmul.f32 %v1302, %v1302
        %v1367 = vmul.f32 %v1303, %v1303
        %v1368 = vmul.f32 %v1304, %v1304
        %v1369 = vmul.f32 %v1305, %v1305
        %v1370 = vmul.f32 %v1306, %v1306
        %v1371 = vmul.f32 %v1307, %v1307
        %v1372 = vmul.f32 %v1308, %v1308
        %v1373 = vmul.f32 %v1309, %v1309
        %v1374 = vmul.f32 %v1310, %v1310
        %v1375 = vmul.f32 %v1311, %v1311
        %v1376 = vmul.f32 %v1312, %v1312
        %1377 = vadd.xlane.f32.xlu0 %v1361
        %v1378 = vpop.xlane.xlu0 %1377
        %1379 = vadd.xlane.f32.xlu0 %v1362
        %v1380 = vpop.xlane.xlu0 %1379
        %1381 = vadd.xlane.f32.xlu0 %v1363
        %v1382 = vpop.xlane.xlu0 %1381
        %1383 = vadd.xlane.f32.xlu0 %v1364
        %v1384 = vpop.xlane.xlu0 %1383
        %1385 = vadd.xlane.f32.xlu0 %v1365
        %v1386 = vpop.xlane.xlu0 %1385
        %1387 = vadd.xlane.f32.xlu0 %v1366
        %v1388 = vpop.xlane.xlu0 %1387
        %1389 = vadd.xlane.f32.xlu0 %v1367
        %v1390 = vpop.xlane.xlu0 %1389
        %1391 = vadd.xlane.f32.xlu0 %v1368
        %v1392 = vpop.xlane.xlu0 %1391
        %1393 = vadd.xlane.f32.xlu0 %v1369
        %v1394 = vpop.xlane.xlu0 %1393
        %1395 = vadd.xlane.f32.xlu0 %v1370
        %v1396 = vpop.xlane.xlu0 %1395
        %1397 = vadd.xlane.f32.xlu0 %v1371
        %v1398 = vpop.xlane.xlu0 %1397
        %1399 = vadd.xlane.f32.xlu0 %v1372
        %v1400 = vpop.xlane.xlu0 %1399
        %1401 = vadd.xlane.f32.xlu0 %v1373
        %v1402 = vpop.xlane.xlu0 %1401
        %1403 = vadd.xlane.f32.xlu0 %v1374
        %v1404 = vpop.xlane.xlu0 %1403
        %1405 = vadd.xlane.f32.xlu0 %v1375
        %v1406 = vpop.xlane.xlu0 %1405
        %1407 = vadd.xlane.f32.xlu0 %v1376
        %v1408 = vpop.xlane.xlu0 %1407
        %v1409 = vmul.f32 %v1378, 0.125
        %v1410 = vmul.f32 %v1380, 0.125
        %v1411 = vmul.f32 %v1382, 0.125
        %v1412 = vmul.f32 %v1384, 0.125
        %v1413 = vmul.f32 %v1386, 0.125
        %v1414 = vmul.f32 %v1388, 0.125
        %v1415 = vmul.f32 %v1390, 0.125
        %v1416 = vmul.f32 %v1392, 0.125
        %v1417 = vmul.f32 %v1394, 0.125
        %v1418 = vmul.f32 %v1396, 0.125
        %v1419 = vmul.f32 %v1398, 0.125
        %v1420 = vmul.f32 %v1400, 0.125
        %v1421 = vmul.f32 %v1402, 0.125
        %v1422 = vmul.f32 %v1404, 0.125
        %v1423 = vmul.f32 %v1406, 0.125
        %v1424 = vmul.f32 %v1408, 0.125
        %v1425 = vmul.f32 %v1345, %v1345
        %v1426 = vmul.f32 %v1346, %v1346
        %v1427 = vmul.f32 %v1347, %v1347
        %v1428 = vmul.f32 %v1348, %v1348
        %v1429 = vmul.f32 %v1349, %v1349
        %v1430 = vmul.f32 %v1350, %v1350
        %v1431 = vmul.f32 %v1351, %v1351
        %v1432 = vmul.f32 %v1352, %v1352
        %v1433 = vmul.f32 %v1353, %v1353
        %v1434 = vmul.f32 %v1354, %v1354
        %v1435 = vmul.f32 %v1355, %v1355
        %v1436 = vmul.f32 %v1356, %v1356
        %v1437 = vmul.f32 %v1357, %v1357
        %v1438 = vmul.f32 %v1358, %v1358
        %v1439 = vmul.f32 %v1359, %v1359
        %v1440 = vmul.f32 %v1360, %v1360
        %v1441 = vsub.f32 %v1409, %v1425
        %v1442 = vsub.f32 %v1410, %v1426
        %v1443 = vsub.f32 %v1411, %v1427
        %v1444 = vsub.f32 %v1412, %v1428
        %v1445 = vsub.f32 %v1413, %v1429
        %v1446 = vsub.f32 %v1414, %v1430
        %v1447 = vsub.f32 %v1415, %v1431
        %v1448 = vsub.f32 %v1416, %v1432
        %v1449 = vsub.f32 %v1417, %v1433
        %v1450 = vsub.f32 %v1418, %v1434
        %v1451 = vsub.f32 %v1419, %v1435
        %v1452 = vsub.f32 %v1420, %v1436
        %v1453 = vsub.f32 %v1421, %v1437
        %v1454 = vsub.f32 %v1422, %v1438
        %v1455 = vsub.f32 %v1423, %v1439
        %v1456 = vsub.f32 %v1424, %v1440
        %v1457 = vsub.f32 %v1247, %v1345
        %v1458 = vsub.f32 %v1250, %v1346
        %v1459 = vsub.f32 %v1253, %v1347
        %v1460 = vsub.f32 %v1256, %v1348
        %v1461 = vsub.f32 %v1259, %v1349
        %v1462 = vsub.f32 %v1262, %v1350
        %v1463 = vsub.f32 %v1265, %v1351
        %v1464 = vsub.f32 %v1268, %v1352
        %v1465 = vsub.f32 %v1271, %v1353
        %v1466 = vsub.f32 %v1274, %v1354
        %v1467 = vsub.f32 %v1277, %v1355
        %v1468 = vsub.f32 %v1280, %v1356
        %v1469 = vsub.f32 %v1283, %v1357
        %v1470 = vsub.f32 %v1286, %v1358
        %v1471 = vsub.f32 %v1289, %v1359
        %v1472 = vsub.f32 %v1292, %v1360
        %v1473 = vadd.f32 %v1441, 1e-05
        %v1474 = vadd.f32 %v1442, 1e-05
        %v1475 = vadd.f32 %v1443, 1e-05
        %v1476 = vadd.f32 %v1444, 1e-05
        %v1477 = vadd.f32 %v1445, 1e-05
        %v1478 = vadd.f32 %v1446, 1e-05
        %v1479 = vadd.f32 %v1447, 1e-05
        %v1480 = vadd.f32 %v1448, 1e-05
        %v1481 = vadd.f32 %v1449, 1e-05
        %v1482 = vadd.f32 %v1450, 1e-05
        %v1483 = vadd.f32 %v1451, 1e-05
        %v1484 = vadd.f32 %v1452, 1e-05
        %v1485 = vadd.f32 %v1453, 1e-05
        %v1486 = vadd.f32 %v1454, 1e-05
        %v1487 = vadd.f32 %v1455, 1e-05
        %v1488 = vadd.f32 %v1456, 1e-05
        %v1489 = vrsqrt.pop %v1473
        %v1490 = vmul.f32 %v1489, %v1473
        %v1491 = vmul.f32 %v1490, %v1489
        %v1492 = vmul.f32 0.5, %v1491
        %v1493 = vsub.f32 1.5, %v1492
        %v1494 = vmul.f32 %v1489, %v1493
        %vm1495 = vweird.f32 %v1473
        %vm1496 = vweird.f32 %v1489
        %vm1497 = vmor %vm1495, %vm1496
        %v1498 = vsel %vm1497, %v1489, %v1494
        %v1499 = vrsqrt.pop %v1474
        %v1500 = vmul.f32 %v1499, %v1474
        %v1501 = vmul.f32 %v1500, %v1499
        %v1502 = vmul.f32 0.5, %v1501
        %v1503 = vsub.f32 1.5, %v1502
        %v1504 = vmul.f32 %v1499, %v1503
        %vm1505 = vweird.f32 %v1474
        %vm1506 = vweird.f32 %v1499
        %vm1507 = vmor %vm1505, %vm1506
        %v1508 = vsel %vm1507, %v1499, %v1504
        %v1509 = vrsqrt.pop %v1475
        %v1510 = vmul.f32 %v1509, %v1475
        %v1511 = vmul.f32 %v1510, %v1509
        %v1512 = vmul.f32 0.5, %v1511
        %v1513 = vsub.f32 1.5, %v1512
        %v1514 = vmul.f32 %v1509, %v1513
        %vm1515 = vweird.f32 %v1475
        %vm1516 = vweird.f32 %v1509
        %vm1517 = vmor %vm1515, %vm1516
        %v1518 = vsel %vm1517, %v1509, %v1514
        %v1519 = vrsqrt.pop %v1476
        %v1520 = vmul.f32 %v1519, %v1476
        %v1521 = vmul.f32 %v1520, %v1519
        %v1522 = vmul.f32 0.5, %v1521
        %v1523 = vsub.f32 1.5, %v1522
        %v1524 = vmul.f32 %v1519, %v1523
        %vm1525 = vweird.f32 %v1476
        %vm1526 = vweird.f32 %v1519
        %vm1527 = vmor %vm1525, %vm1526
        %v1528 = vsel %vm1527, %v1519, %v1524
        %v1529 = vrsqrt.pop %v1477
        %v1530 = vmul.f32 %v1529, %v1477
        %v1531 = vmul.f32 %v1530, %v1529
        %v1532 = vmul.f32 0.5, %v1531
        %v1533 = vsub.f32 1.5, %v1532
        %v1534 = vmul.f32 %v1529, %v1533
        %vm1535 = vweird.f32 %v1477
        %vm1536 = vweird.f32 %v1529
        %vm1537 = vmor %vm1535, %vm1536
        %v1538 = vsel %vm1537, %v1529, %v1534
        %v1539 = vrsqrt.pop %v1478
        %v1540 = vmul.f32 %v1539, %v1478
        %v1541 = vmul.f32 %v1540, %v1539
        %v1542 = vmul.f32 0.5, %v1541
        %v1543 = vsub.f32 1.5, %v1542
        %v1544 = vmul.f32 %v1539, %v1543
        %vm1545 = vweird.f32 %v1478
        %vm1546 = vweird.f32 %v1539
        %vm1547 = vmor %vm1545, %vm1546
        %v1548 = vsel %vm1547, %v1539, %v1544
        %v1549 = vrsqrt.pop %v1479
        %v1550 = vmul.f32 %v1549, %v1479
        %v1551 = vmul.f32 %v1550, %v1549
        %v1552 = vmul.f32 0.5, %v1551
        %v1553 = vsub.f32 1.5, %v1552
        %v1554 = vmul.f32 %v1549, %v1553
        %vm1555 = vweird.f32 %v1479
        %vm1556 = vweird.f32 %v1549
        %vm1557 = vmor %vm1555, %vm1556
        %v1558 = vsel %vm1557, %v1549, %v1554
        %v1559 = vrsqrt.pop %v1480
        %v1560 = vmul.f32 %v1559, %v1480
        %v1561 = vmul.f32 %v1560, %v1559
        %v1562 = vmul.f32 0.5, %v1561
        %v1563 = vsub.f32 1.5, %v1562
        %v1564 = vmul.f32 %v1559, %v1563
        %vm1565 = vweird.f32 %v1480
        %vm1566 = vweird.f32 %v1559
        %vm1567 = vmor %vm1565, %vm1566
        %v1568 = vsel %vm1567, %v1559, %v1564
        %v1569 = vrsqrt.pop %v1481
        %v1570 = vmul.f32 %v1569, %v1481
        %v1571 = vmul.f32 %v1570, %v1569
        %v1572 = vmul.f32 0.5, %v1571
        %v1573 = vsub.f32 1.5, %v1572
        %v1574 = vmul.f32 %v1569, %v1573
        %vm1575 = vweird.f32 %v1481
        %vm1576 = vweird.f32 %v1569
        %vm1577 = vmor %vm1575, %vm1576
        %v1578 = vsel %vm1577, %v1569, %v1574
        %v1579 = vrsqrt.pop %v1482
        %v1580 = vmul.f32 %v1579, %v1482
        %v1581 = vmul.f32 %v1580, %v1579
        %v1582 = vmul.f32 0.5, %v1581
        %v1583 = vsub.f32 1.5, %v1582
        %v1584 = vmul.f32 %v1579, %v1583
        %vm1585 = vweird.f32 %v1482
        %vm1586 = vweird.f32 %v1579
        %vm1587 = vmor %vm1585, %vm1586
        %v1588 = vsel %vm1587, %v1579, %v1584
        %v1589 = vrsqrt.pop %v1483
        %v1590 = vmul.f32 %v1589, %v1483
        %v1591 = vmul.f32 %v1590, %v1589
        %v1592 = vmul.f32 0.5, %v1591
        %v1593 = vsub.f32 1.5, %v1592
        %v1594 = vmul.f32 %v1589, %v1593
        %vm1595 = vweird.f32 %v1483
        %vm1596 = vweird.f32 %v1589
        %vm1597 = vmor %vm1595, %vm1596
        %v1598 = vsel %vm1597, %v1589, %v1594
        %v1599 = vrsqrt.pop %v1484
        %v1600 = vmul.f32 %v1599, %v1484
        %v1601 = vmul.f32 %v1600, %v1599
        %v1602 = vmul.f32 0.5, %v1601
        %v1603 = vsub.f32 1.5, %v1602
        %v1604 = vmul.f32 %v1599, %v1603
        %vm1605 = vweird.f32 %v1484
        %vm1606 = vweird.f32 %v1599
        %vm1607 = vmor %vm1605, %vm1606
        %v1608 = vsel %vm1607, %v1599, %v1604
        %v1609 = vrsqrt.pop %v1485
        %v1610 = vmul.f32 %v1609, %v1485
        %v1611 = vmul.f32 %v1610, %v1609
        %v1612 = vmul.f32 0.5, %v1611
        %v1613 = vsub.f32 1.5, %v1612
        %v1614 = vmul.f32 %v1609, %v1613
        %vm1615 = vweird.f32 %v1485
        %vm1616 = vweird.f32 %v1609
        %vm1617 = vmor %vm1615, %vm1616
        %v1618 = vsel %vm1617, %v1609, %v1614
        %v1619 = vrsqrt.pop %v1486
        %v1620 = vmul.f32 %v1619, %v1486
        %v1621 = vmul.f32 %v1620, %v1619
        %v1622 = vmul.f32 0.5, %v1621
        %v1623 = vsub.f32 1.5, %v1622
        %v1624 = vmul.f32 %v1619, %v1623
        %vm1625 = vweird.f32 %v1486
        %vm1626 = vweird.f32 %v1619
        %vm1627 = vmor %vm1625, %vm1626
        %v1628 = vsel %vm1627, %v1619, %v1624
        %v1629 = vrsqrt.pop %v1487
        %v1630 = vmul.f32 %v1629, %v1487
        %v1631 = vmul.f32 %v1630, %v1629
        %v1632 = vmul.f32 0.5, %v1631
        %v1633 = vsub.f32 1.5, %v1632
        %v1634 = vmul.f32 %v1629, %v1633
        %vm1635 = vweird.f32 %v1487
        %vm1636 = vweird.f32 %v1629
        %vm1637 = vmor %vm1635, %vm1636
        %v1638 = vsel %vm1637, %v1629, %v1634
        %v1639 = vrsqrt.pop %v1488
        %v1640 = vmul.f32 %v1639, %v1488
        %v1641 = vmul.f32 %v1640, %v1639
        %v1642 = vmul.f32 0.5, %v1641
        %v1643 = vsub.f32 1.5, %v1642
        %v1644 = vmul.f32 %v1639, %v1643
        %vm1645 = vweird.f32 %v1488
        %vm1646 = vweird.f32 %v1639
        %vm1647 = vmor %vm1645, %vm1646
        %v1648 = vsel %vm1647, %v1639, %v1644
        %v1649 = vmul.f32 %v1457, %v1498
        %v1650 = vmul.f32 %v1458, %v1508
        %v1651 = vmul.f32 %v1459, %v1518
        %v1652 = vmul.f32 %v1460, %v1528
        %v1653 = vmul.f32 %v1461, %v1538
        %v1654 = vmul.f32 %v1462, %v1548
        %v1655 = vmul.f32 %v1463, %v1558
        %v1656 = vmul.f32 %v1464, %v1568
        %v1657 = vmul.f32 %v1465, %v1578
        %v1658 = vmul.f32 %v1466, %v1588
        %v1659 = vmul.f32 %v1467, %v1598
        %v1660 = vmul.f32 %v1468, %v1608
        %v1661 = vmul.f32 %v1469, %v1618
        %v1662 = vmul.f32 %v1470, %v1628
        %v1663 = vmul.f32 %v1471, %v1638
        %v1664 = vmul.f32 %v1472, %v1648
        %v1665 = vld [vmem:[%s7] sm:$0x1]
        %v1667 = vperm.slane %v1665, 0
        %v1669 = vmul.f32 %v1649, %v1667
        %v1670 = vmul.f32 %v1650, %v1667
        %v1671 = vmul.f32 %v1651, %v1667
        %v1672 = vmul.f32 %v1652, %v1667
        %v1673 = vmul.f32 %v1653, %v1667
        %v1674 = vmul.f32 %v1654, %v1667
        %v1675 = vmul.f32 %v1655, %v1667
        %v1676 = vmul.f32 %v1656, %v1667
        %v1677 = vmul.f32 %v1657, %v1667
        %v1678 = vmul.f32 %v1658, %v1667
        %v1679 = vmul.f32 %v1659, %v1667
        %v1680 = vmul.f32 %v1660, %v1667
        %v1681 = vmul.f32 %v1661, %v1667
        %v1682 = vmul.f32 %v1662, %v1667
        %v1683 = vmul.f32 %v1663, %v1667
        %v1684 = vmul.f32 %v1664, %v1667
        %v1685 = vld [vmem:[%s8] sm:$0x1]
        %v1687 = vperm.slane %v1685, 0
        %v1689 = vadd.f32 %v1669, %v1687
        %v1690 = vadd.f32 %v1670, %v1687
        %v1691 = vadd.f32 %v1671, %v1687
        %v1692 = vadd.f32 %v1672, %v1687
        %v1693 = vadd.f32 %v1673, %v1687
        %v1694 = vadd.f32 %v1674, %v1687
        %v1695 = vadd.f32 %v1675, %v1687
        %v1696 = vadd.f32 %v1676, %v1687
        %v1697 = vadd.f32 %v1677, %v1687
        %v1698 = vadd.f32 %v1678, %v1687
        %v1699 = vadd.f32 %v1679, %v1687
        %v1700 = vadd.f32 %v1680, %v1687
        %v1701 = vadd.f32 %v1681, %v1687
        %v1702 = vadd.f32 %v1682, %v1687
        %v1703 = vadd.f32 %v1683, %v1687
        %v1704 = vadd.f32 %v1684, %v1687
        %v1705 = vmax.f32 %v1689, -10.0
        %v1706 = vmax.f32 %v1690, -10.0
        %v1707 = vmax.f32 %v1691, -10.0
        %v1708 = vmax.f32 %v1692, -10.0
        %v1709 = vmax.f32 %v1693, -10.0
        %v1710 = vmax.f32 %v1694, -10.0
        %v1711 = vmax.f32 %v1695, -10.0
        %v1712 = vmax.f32 %v1696, -10.0
        %v1713 = vmax.f32 %v1697, -10.0
        %v1714 = vmax.f32 %v1698, -10.0
        %v1715 = vmax.f32 %v1699, -10.0
        %v1716 = vmax.f32 %v1700, -10.0
        %v1717 = vmax.f32 %v1701, -10.0
        %v1718 = vmax.f32 %v1702, -10.0
        %v1719 = vmax.f32 %v1703, -10.0
        %v1720 = vmax.f32 %v1704, -10.0
        %v1721 = vmin.f32 %v1705, 10.0
        %v1722 = vmin.f32 %v1706, 10.0
        %v1723 = vmin.f32 %v1707, 10.0
        %v1724 = vmin.f32 %v1708, 10.0
        %v1725 = vmin.f32 %v1709, 10.0
        %v1726 = vmin.f32 %v1710, 10.0
        %v1727 = vmin.f32 %v1711, 10.0
        %v1728 = vmin.f32 %v1712, 10.0
        %v1729 = vmin.f32 %v1713, 10.0
        %v1730 = vmin.f32 %v1714, 10.0
        %v1731 = vmin.f32 %v1715, 10.0
        %v1732 = vmin.f32 %v1716, 10.0
        %v1733 = vmin.f32 %v1717, 10.0
        %v1734 = vmin.f32 %v1718, 10.0
        %v1735 = vmin.f32 %v1719, 10.0
        %v1736 = vmin.f32 %v1720, 10.0
        %v1737 = vld [vmem:[%s328] sm:$0xff]
        %v1738 = vld [vmem:[%s328 + $0x8] sm:$0xff]
        %v1739 = vld [vmem:[%s328 + $0x10] sm:$0xff]
        %v1740 = vld [vmem:[%s328 + $0x18] sm:$0xff]
        %v1741 = vld [vmem:[%s328 + $0x20] sm:$0xff]
        %v1742 = vld [vmem:[%s328 + $0x28] sm:$0xff]
        %v1743 = vld [vmem:[%s328 + $0x30] sm:$0xff]
        %v1744 = vld [vmem:[%s328 + $0x38] sm:$0xff]
        %v1745 = vld [vmem:[%s328 + $0x40] sm:$0xff]
        %v1746 = vld [vmem:[%s328 + $0x48] sm:$0xff]
        %v1747 = vld [vmem:[%s328 + $0x50] sm:$0xff]
        %v1748 = vld [vmem:[%s328 + $0x58] sm:$0xff]
        %v1749 = vld [vmem:[%s328 + $0x60] sm:$0xff]
        %v1750 = vld [vmem:[%s328 + $0x68] sm:$0xff]
        %v1751 = vld [vmem:[%s328 + $0x70] sm:$0xff]
        %v1752 = vld [vmem:[%s328 + $0x78] sm:$0xff]
        %s1753 = sld [smem:[#allocation3]]
        %v1754 = vstv %s1753
        %vm1755 = vcmp.ge.s32.totalorder %v1737, %v1754
        %vm1756 = vcmp.ge.s32.totalorder %v1738, %v1754
        %vm1757 = vcmp.ge.s32.totalorder %v1739, %v1754
        %vm1758 = vcmp.ge.s32.totalorder %v1740, %v1754
        %vm1759 = vcmp.ge.s32.totalorder %v1741, %v1754
        %vm1760 = vcmp.ge.s32.totalorder %v1742, %v1754
        %vm1761 = vcmp.ge.s32.totalorder %v1743, %v1754
        %vm1762 = vcmp.ge.s32.totalorder %v1744, %v1754
        %vm1763 = vcmp.ge.s32.totalorder %v1745, %v1754
        %vm1764 = vcmp.ge.s32.totalorder %v1746, %v1754
        %vm1765 = vcmp.ge.s32.totalorder %v1747, %v1754
        %vm1766 = vcmp.ge.s32.totalorder %v1748, %v1754
        %vm1767 = vcmp.ge.s32.totalorder %v1749, %v1754
        %vm1768 = vcmp.ge.s32.totalorder %v1750, %v1754
        %vm1769 = vcmp.ge.s32.totalorder %v1751, %v1754
        %vm1770 = vcmp.ge.s32.totalorder %v1752, %v1754
        %v1771 = vsel %vm1755, 1, 0
        %v1772 = vsel %vm1756, 1, 0
        %v1773 = vsel %vm1757, 1, 0
        %v1774 = vsel %vm1758, 1, 0
        %v1775 = vsel %vm1759, 1, 0
        %v1776 = vsel %vm1760, 1, 0
        %v1777 = vsel %vm1761, 1, 0
        %v1778 = vsel %vm1762, 1, 0
        %v1779 = vsel %vm1763, 1, 0
        %v1780 = vsel %vm1764, 1, 0
        %v1781 = vsel %vm1765, 1, 0
        %v1782 = vsel %vm1766, 1, 0
        %v1783 = vsel %vm1767, 1, 0
        %v1784 = vsel %vm1768, 1, 0
        %v1785 = vsel %vm1769, 1, 0
        %v1786 = vsel %vm1770, 1, 0
        %v1787 = vcvt.s32.f32 %v1771
        %v1788 = vcvt.s32.f32 %v1772
        %v1789 = vcvt.s32.f32 %v1773
        %v1790 = vcvt.s32.f32 %v1774
        %v1791 = vcvt.s32.f32 %v1775
        %v1792 = vcvt.s32.f32 %v1776
        %v1793 = vcvt.s32.f32 %v1777
        %v1794 = vcvt.s32.f32 %v1778
        %v1795 = vcvt.s32.f32 %v1779
        %v1796 = vcvt.s32.f32 %v1780
        %v1797 = vcvt.s32.f32 %v1781
        %v1798 = vcvt.s32.f32 %v1782
        %v1799 = vcvt.s32.f32 %v1783
        %v1800 = vcvt.s32.f32 %v1784
        %v1801 = vcvt.s32.f32 %v1785
        %v1802 = vcvt.s32.f32 %v1786
        %v1803 = vlaneseq
        %v1804 = vshrl.u32 %v1803, 7
        %vm1805 = vcmp.eq.s32.totalorder %v1804, %v1295
        %v1806 = vsel %vm1805, 1, 0
        %v1807 = vcvt.s32.f32 %v1806
        %vm1808 = vcmask 56320
        %v1810 = vsel %vm1808, %v1787, 0
        %v1813 = vsel %vm1808, %v1788, 0
        %v1816 = vsel %vm1808, %v1789, 0
        %v1819 = vsel %vm1808, %v1790, 0
        %v1822 = vsel %vm1808, %v1791, 0
        %v1825 = vsel %vm1808, %v1792, 0
        %v1828 = vsel %vm1808, %v1793, 0
        %v1831 = vsel %vm1808, %v1794, 0
        %v1834 = vsel %vm1808, %v1795, 0
        %v1837 = vsel %vm1808, %v1796, 0
        %v1840 = vsel %vm1808, %v1797, 0
        %v1843 = vsel %vm1808, %v1798, 0
        %v1846 = vsel %vm1808, %v1799, 0
        %v1849 = vsel %vm1808, %v1800, 0
        %v1852 = vsel %vm1808, %v1801, 0
        %v1855 = vsel %vm1808, %v1802, 0
        %vm1857 = vcmask 1046528
        %v1859 = vsel %vm1857, %v1807, 0
        %1861 = vmatpush.msra.mxu0 0.0
        %1862 = vmatpush.msra.mxu0 0.0
        %1863 = vmatpush.msra.mxu0 0.0
        %1864 = vmatpush.msra.mxu0 0.0
        %1865 = vmatpush.msra.mxu0 0.0
        %1866 = vmatpush.msra.mxu0 0.0
        %1867 = vmatpush.msra.mxu0 0.0
        %1868 = vmatpush.msra.mxu0 0.0
        %1869 = vmatpush.msra.mxu0 0.0
        %1870 = vmatpush.msra.mxu0 0.0
        %1871 = vmatpush.msra.mxu0 0.0
        %1872 = vmatpush.msra.mxu0 0.0
        %1873 = vmatpush.msra.mxu0 0.0
        %1874 = vmatpush.msra.mxu0 0.0
        %1875 = vmatpush.msra.mxu0 0.0
        %1876 = vmatpush.msra.mxu0 %v1859
        %1877 = vmatmul.f32.gmra.mxu0 %v1810
        %v1878 = vpop.f32.mrf.mxu0
        %v1879 = vadd.f32 0.0, %v1878
        %1880 = vmatmul.f32.gmra.mxu0 %v1813
        %v1881 = vpop.f32.mrf.mxu0
        %v1882 = vadd.f32 0.0, %v1881
        %1883 = vmatmul.f32.gmra.mxu0 %v1816
        %v1884 = vpop.f32.mrf.mxu0
        %v1885 = vadd.f32 0.0, %v1884
        %1886 = vmatmul.f32.gmra.mxu0 %v1819
        %v1887 = vpop.f32.mrf.mxu0
        %v1888 = vadd.f32 0.0, %v1887
        %1889 = vmatmul.f32.gmra.mxu0 %v1822
        %v1890 = vpop.f32.mrf.mxu0
        %v1891 = vadd.f32 0.0, %v1890
        %1892 = vmatmul.f32.gmra.mxu0 %v1825
        %v1893 = vpop.f32.mrf.mxu0
        %v1894 = vadd.f32 0.0, %v1893
        %1895 = vmatmul.f32.gmra.mxu0 %v1828
        %v1896 = vpop.f32.mrf.mxu0
        %v1897 = vadd.f32 0.0, %v1896
        %1898 = vmatmul.f32.gmra.mxu0 %v1831
        %v1899 = vpop.f32.mrf.mxu0
        %v1900 = vadd.f32 0.0, %v1899
        %1901 = vmatmul.f32.gmra.mxu0 %v1834
        %v1902 = vpop.f32.mrf.mxu0
        %v1903 = vadd.f32 0.0, %v1902
        %1904 = vmatmul.f32.gmra.mxu0 %v1837
        %v1905 = vpop.f32.mrf.mxu0
        %v1906 = vadd.f32 0.0, %v1905
        %1907 = vmatmul.f32.gmra.mxu0 %v1840
        %v1908 = vpop.f32.mrf.mxu0
        %v1909 = vadd.f32 0.0, %v1908
        %1910 = vmatmul.f32.gmra.mxu0 %v1843
        %v1911 = vpop.f32.mrf.mxu0
        %v1912 = vadd.f32 0.0, %v1911
        %1913 = vmatmul.f32.gmra.mxu0 %v1846
        %v1914 = vpop.f32.mrf.mxu0
        %v1915 = vadd.f32 0.0, %v1914
        %1916 = vmatmul.f32.gmra.mxu0 %v1849
        %v1917 = vpop.f32.mrf.mxu0
        %v1918 = vadd.f32 0.0, %v1917
        %1919 = vmatmul.f32.gmra.mxu0 %v1852
        %v1920 = vpop.f32.mrf.mxu0
        %v1921 = vadd.f32 0.0, %v1920
        %1922 = vmatmul.f32.gmra.mxu0 %v1855
        %v1923 = vpop.f32.mrf.mxu0
        %v1924 = vadd.f32 0.0, %v1923
        %1925 = vdwg.mxu0
        %vm1926 = vcmp.gt.f32.partialorder %v1879, 0.5
        %vm1927 = vcmp.gt.f32.partialorder %v1882, 0.5
        %vm1928 = vcmp.gt.f32.partialorder %v1885, 0.5
        %vm1929 = vcmp.gt.f32.partialorder %v1888, 0.5
        %vm1930 = vcmp.gt.f32.partialorder %v1891, 0.5
        %vm1931 = vcmp.gt.f32.partialorder %v1894, 0.5
        %vm1932 = vcmp.gt.f32.partialorder %v1897, 0.5
        %vm1933 = vcmp.gt.f32.partialorder %v1900, 0.5
        %vm1934 = vcmp.gt.f32.partialorder %v1903, 0.5
        %vm1935 = vcmp.gt.f32.partialorder %v1906, 0.5
        %vm1936 = vcmp.gt.f32.partialorder %v1909, 0.5
        %vm1937 = vcmp.gt.f32.partialorder %v1912, 0.5
        %vm1938 = vcmp.gt.f32.partialorder %v1915, 0.5
        %vm1939 = vcmp.gt.f32.partialorder %v1918, 0.5
        %vm1940 = vcmp.gt.f32.partialorder %v1921, 0.5
        %vm1941 = vcmp.gt.f32.partialorder %v1924, 0.5
        %vm1942 = vmxor %vm1296, 1
        %vm1943 = vmor %vm1926, %vm1942
        %vm1944 = vmor %vm1927, %vm1942
        %vm1945 = vmor %vm1928, %vm1942
        %vm1946 = vmor %vm1929, %vm1942
        %vm1947 = vmor %vm1930, %vm1942
        %vm1948 = vmor %vm1931, %vm1942
        %vm1949 = vmor %vm1932, %vm1942
        %vm1950 = vmor %vm1933, %vm1942
        %vm1951 = vmor %vm1934, %vm1942
        %vm1952 = vmor %vm1935, %vm1942
        %vm1953 = vmor %vm1936, %vm1942
        %vm1954 = vmor %vm1937, %vm1942
        %vm1955 = vmor %vm1938, %vm1942
        %vm1956 = vmor %vm1939, %vm1942
        %vm1957 = vmor %vm1940, %vm1942
        %vm1958 = vmor %vm1941, %vm1942
        %v1959 = vsel %vm1943, -inf, %v1721
        %v1960 = vsel %vm1944, -inf, %v1722
        %v1961 = vsel %vm1945, -inf, %v1723
        %v1962 = vsel %vm1946, -inf, %v1724
        %v1963 = vsel %vm1947, -inf, %v1725
        %v1964 = vsel %vm1948, -inf, %v1726
        %v1965 = vsel %vm1949, -inf, %v1727
        %v1966 = vsel %vm1950, -inf, %v1728
        %v1967 = vsel %vm1951, -inf, %v1729
        %v1968 = vsel %vm1952, -inf, %v1730
        %v1969 = vsel %vm1953, -inf, %v1731
        %v1970 = vsel %vm1954, -inf, %v1732
        %v1971 = vsel %vm1955, -inf, %v1733
        %v1972 = vsel %vm1956, -inf, %v1734
        %v1973 = vsel %vm1957, -inf, %v1735
        %v1974 = vsel %vm1958, -inf, %v1736
        %1975 = vst [vmem:[%s317] sm:$0xff] %v1959
        %1976 = vst [vmem:[%s317 + $0x8] sm:$0xff] %v1960
        %1977 = vst [vmem:[%s317 + $0x10] sm:$0xff] %v1961
        %1978 = vst [vmem:[%s317 + $0x18] sm:$0xff] %v1962
        %1979 = vst [vmem:[%s317 + $0x20] sm:$0xff] %v1963
        %1980 = vst [vmem:[%s317 + $0x28] sm:$0xff] %v1964
        %1981 = vst [vmem:[%s317 + $0x30] sm:$0xff] %v1965
        %1982 = vst [vmem:[%s317 + $0x38] sm:$0xff] %v1966
        %1983 = vst [vmem:[%s317 + $0x40] sm:$0xff] %v1967
        %1984 = vst [vmem:[%s317 + $0x48] sm:$0xff] %v1968
        %1985 = vst [vmem:[%s317 + $0x50] sm:$0xff] %v1969
        %1986 = vst [vmem:[%s317 + $0x58] sm:$0xff] %v1970
        %1987 = vst [vmem:[%s317 + $0x60] sm:$0xff] %v1971
        %1988 = vst [vmem:[%s317 + $0x68] sm:$0xff] %v1972
        %1989 = vst [vmem:[%s317 + $0x70] sm:$0xff] %v1973
        %1990 = vst [vmem:[%s317 + $0x78] sm:$0xff] %v1974
        %s1991 = sand.u32 %s210, 1
        %s1992 = scalar_lea.sflag [#allocation5], %s1991
        %s1993 = sand.u32 %s210, 1
        %s1994 = smul.addr %s1993, 128
        %s1995 = scalar_lea.vmem [#allocation4], %s1994
        // Predicated region
        $region53: #{tpu_custom_call.1} parent=51 // pred_check
          %p1996 = pneg %p220
        $region54: #{tpu_custom_call.1} parent=51 // pred_check_branch
          %1998 = sbr.rel (%p1996) target = $region56
        $region55: #{tpu_custom_call.1} parent=51 // pred_region
          %s1999 = smul.u32 16, %s24
          %2001 = vsyncadd %s1992, 0
          %s2002 = smul.addr %s1999, 8
          %s2003 = scalar_lea.hbm %s9, %s2002
          %s2004 = sshll.u32 %s1995, 4
          %s2005 = int_to_ptr.vmem [resolvable:$true] %s2004
          %s2006 = sshll.u32 %s2003, 4
          %s2007 = int_to_ptr.hbm [resolvable:$true] %s2006
          %2012 = dma.vmem_to_hbm [thread:$0]  %s2005, 2048, %s2007, %s1992, 128, 128, 8
        $region56: #{tpu_custom_call.1} parent=51 // pred_fallthru
          _
      $region52: #{tpu_custom_call.1} parent=5 // pred_fallthru
        _
      %p2013 = scmp.le.s32.totalorder 2, %s19
      // Predicated region
      $region57: #{tpu_custom_call.1} parent=5 // pred_check
        %p2014 = pneg %p2013
      $region58: #{tpu_custom_call.1} parent=5 // pred_check_branch
        %2016 = sbr.rel (%p2014) target = $region60
      $region59: #{tpu_custom_call.1} parent=5 // pred_region
        %s2017 = ssub.s32 %s19, 2
        // Predicated region
        $region61: #{tpu_custom_call.1} parent=59 // pred_check
          %p2018 = pneg %p226
        $region62: #{tpu_custom_call.1} parent=59 // pred_check_branch
          %2020 = sbr.rel (%p2018) target = $region64
        $region63: #{tpu_custom_call.1} parent=59 // pred_region
          %s2021 = sand.u32 %s211, 1
          %s2022 = scalar_lea.sflag [#allocation5], %s2021
          %s2023 = sand.u32 %s211, 1
          %s2024 = smul.addr %s2023, 128
          %s2025 = scalar_lea.vmem [#allocation4], %s2024
          %2027 = dma.done %s2022, 2048
        $region64: #{tpu_custom_call.1} parent=59 // pred_fallthru
          _
      $region60: #{tpu_custom_call.1} parent=5 // pred_fallthru
        _
    $region6: #{tpu_custom_call.1} parent=1 // loop_footer
      %s23 = sadd.s32 1, %s19
    $region7: #{tpu_custom_call.1} parent=1 // loop_footer_branch
      %18 = sbr.rel target = $region3
    $region8: #{tpu_custom_call.1} parent=1 // loop_exit
      _
    %2028 = vsyncpa [#allocation5], 1
    %s2029 = scalar_lea.sflag [#allocation5], 1
    %2030 = vsyncpa %s2029, 1

</llo_original>
